<compile_context>
chip_gen: v6e
topology: v6e:2x2x1
jax: 0.10.0
libtpu: 0.0.40
codegen_flags: <defaults>
</compile_context>

<pallas_src>
import functools

import jax
import jax.numpy as jnp
from jax.experimental import pallas as pl
from jax.experimental.pallas import tpu as pltpu


# ----------------------------------------------------------------------------
# Fused Transporter forward kernel (B_blk batch elements per grid step)
# ----------------------------------------------------------------------------
def _transporter_kernel(
    src_ref, tgt_ref, gy_ref, gx_ref, p_ref,
    recon_ref, mu_ref,
    *, in_ch, feat_ch, num_kp, inv_var, b_blk,
):
    gy = gy_ref[...]          # (1, HW) per-pixel y coordinate (row linspace)
    gx = gx_ref[...]          # (1, HW) per-pixel x coordinate (col linspace)

    # Static offsets into the packed SMEM parameter vector.
    wf_off = 0
    bf_off = wf_off + feat_ch * in_ch
    wp_off = bf_off + feat_ch
    bp_off = wp_off + num_kp * in_ch
    wr_off = bp_off + num_kp
    br_off = wr_off + in_ch * feat_ch

    def conv_rows(x, w_off, b_off, cin, cout):
        # 1x1 conv as per-output-row scalar*vector FMA chains.  Weights/biases
        # are SMEM scalars riding the scalar slot; no VMEM weight tiles and no
        # (cout, 1) lane broadcasts.  Returns a list of (1, HW) rows.
        rows = []
        for o in range(cout):
            acc = p_ref[w_off + o * cin] * x[0:1, :] + p_ref[b_off + o]
            for c in range(1, cin):
                acc = acc + p_ref[w_off + o * cin + c] * x[c:c + 1, :]
            rows.append(acc)
        return rows

    # Static unroll over the batch block (b_blk is kept small by the wrapper).
    for b in range(b_blk):
        src = src_ref[b].astype(jnp.float32)        # (Cin, HW)  bf16 -> f32
        tgt = tgt_ref[b].astype(jnp.float32)        # (Cin, HW)

        # --- point_net / feature_encoder, src & tgt stacked along sublanes so
        #     the heavy elementwise math below runs on full (8, HW) vregs.
        logits2 = jnp.concatenate(
            conv_rows(src, wp_off, bp_off, in_ch, num_kp)
            + conv_rows(tgt, wp_off, bp_off, in_ch, num_kp), axis=0)   # (2K, HW)
        feat2 = jnp.concatenate(
            conv_rows(src, wf_off, bf_off, in_ch, feat_ch)
            + conv_rows(tgt, wf_off, bf_off, in_ch, feat_ch), axis=0)  # (2F, HW)

        # --- spatial softmax over HW + keypoint means + gaussian map, all on
        #     the stacked (2K, HW) array; the normalized probability map is
        #     never materialized (only the (2K,1) reciprocal of the sum is).
        m = jnp.max(logits2, axis=-1, keepdims=True)                 # (2K, 1)
        e = jnp.exp(logits2 - m)                                     # (2K, HW)
        inv_s = 1.0 / jnp.sum(e, axis=-1, keepdims=True)             # (2K, 1)
        u_row = jnp.sum(e * gy, axis=-1, keepdims=True) * inv_s      # (2K, 1)
        u_col = jnp.sum(e * gx, axis=-1, keepdims=True) * inv_s      # (2K, 1)
        # dist = ((y - mu_y)^2 + (x - mu_x)^2) * (1/std)^2  (reference: no 1/2)
        dist = ((gy - u_row) ** 2 + (gx - u_col) ** 2) * inv_var
        heat2 = jnp.exp(-dist)                                       # (2K, HW)

        src_feat = feat2[0:feat_ch]                                  # (F, HW)
        tgt_feat = feat2[feat_ch:2 * feat_ch]                        # (F, HW)
        t_heat = heat2[num_kp:2 * num_kp]                            # (K, HW)

        # --- transport: independent work hoisted out of the serial chain.
        one_minus = 1.0 - heat2                                      # (2K, HW)
        g_all = one_minus[0:num_kp] * one_minus[num_kp:2 * num_kp]   # (K, HW)
        tv = [t_heat[k:k + 1, :] * tgt_feat for k in range(num_kp)]  # K x (F, HW)
        out = src_feat
        for k in range(num_kp):
            out = g_all[k:k + 1, :] * out + tv[k]

        # --- refine net back to image channels -> lane-dense (C, HW) store.
        recon_ref[b] = jnp.concatenate(
            conv_rows(out, wr_off, br_off, feat_ch, in_ch), axis=0)

        # --- source-branch keypoint means rescaled to [0, 1]; tiny (K, 2) store.
        u_row_n = (u_row[0:num_kp] + 1.0) * 0.5                      # (K, 1)
        u_col_n = (u_col[0:num_kp] + 1.0) * 0.5                      # (K, 1)
        lane = jax.lax.broadcasted_iota(jnp.int32, (num_kp, 2), 1)
        mu_ref[b] = jnp.where(lane == 0, u_row_n, u_col_n)           # (K, 2)


def _choose_batch_block(N, in_ch, feat_ch, num_kp, HW):
    """Pick the batch block B_blk and grid step count.

    Constraints (perf review):
      * B_blk divides N.
      * Prefer >= 2 and even grid steps so v7x's two TensorCores stay busy
        and balanced under dimension_semantics=("parallel",).
      * Per-step VMEM footprint (double-buffered in/out blocks + f32 working
        set) stays under ~12 MiB — safe on v5e/v6e scoped defaults and well
        under v7x's smaller 64 MiB physical VMEM.
      * Capped at 16 to bound the static unroll length inside the kernel.
    """
    per_elem = (
        2 * 2 * (2 * in_ch * HW * 2)                    # src+tgt bf16 blocks, x2 dbuf
        + 2 * (in_ch * HW * 4 + num_kp * 2 * 4)         # recon + mu f32 blocks, x2 dbuf
        + (4 * in_ch + 6 * num_kp + 3 * feat_ch) * HW * 4)  # live f32 temporaries
    budget = 12 * 1024 * 1024
    max_blk = int(max(1, min(16, budget // max(per_elem, 1))))

    best = 1
    for d in range(1, N + 1):
        if N % d or d > max_blk:
            continue
        steps = N // d
        if steps >= 2 and steps % 2 == 0:
            best = max(best, d)
    if best == 1:
        # Fall back to the largest admissible divisor even if the step count
        # ends up odd / equal to 1 (e.g. N == 1 or N prime).
        for d in range(1, N + 1):
            if N % d == 0 and d <= max_blk and N // d >= 2:
                best = max(best, d)
    return best, N // best


def transporter_forward(source_images, target_images,
                        w_feat, b_feat, w_pt, b_pt, w_refine, b_refine, *, std):
    N, C, H, W = source_images.shape
    HW = H * W
    feat_ch = w_feat.shape[0]
    num_kp = w_pt.shape[0]

    # NCHW -> (N, C, H*W) is a pure reshape (no transposes).  bf16 halves the
    # HBM read bytes; the kernel upcasts to f32 right after load.
    src = source_images.reshape(N, C, HW).astype(jnp.bfloat16)
    tgt = target_images.reshape(N, C, HW).astype(jnp.bfloat16)

    # Per-pixel coordinate rows (match torch.linspace(-1, 1, .) exactly).
    lin_h = jnp.linspace(-1.0, 1.0, H, dtype=jnp.float32)
    lin_w = jnp.linspace(-1.0, 1.0, W, dtype=jnp.float32)
    gy = jnp.broadcast_to(lin_h[:, None], (H, W)).reshape(1, HW)
    gx = jnp.broadcast_to(lin_w[None, :], (H, W)).reshape(1, HW)

    # All 1x1-conv weights/biases packed into one small SMEM scalar vector.
    params = jnp.concatenate([
        w_feat.reshape(-1), b_feat.reshape(-1),
        w_pt.reshape(-1), b_pt.reshape(-1),
        w_refine.reshape(-1), b_refine.reshape(-1)]).astype(jnp.float32)

    b_blk, steps = _choose_batch_block(N, C, feat_ch, num_kp, HW)

    kernel = functools.partial(
        _transporter_kernel, in_ch=C, feat_ch=feat_ch, num_kp=num_kp,
        inv_var=float((1.0 / std) ** 2), b_blk=b_blk)

    recon_flat, mu_t = pl.pallas_call(
        kernel,
        out_shape=(
            jax.ShapeDtypeStruct((N, C, HW), jnp.float32),
            jax.ShapeDtypeStruct((N, num_kp, 2), jnp.float32),
        ),
        grid=(steps,),
        in_specs=[
            pl.BlockSpec((b_blk, C, HW), lambda n: (n, 0, 0)),       # source imgs
            pl.BlockSpec((b_blk, C, HW), lambda n: (n, 0, 0)),       # target imgs
            pl.BlockSpec((1, HW), lambda n: (0, 0)),                 # y grid
            pl.BlockSpec((1, HW), lambda n: (0, 0)),                 # x grid
            pl.BlockSpec(memory_space=pltpu.MemorySpace.SMEM),       # packed params
        ],
        out_specs=(
            pl.BlockSpec((b_blk, C, HW), lambda n: (n, 0, 0)),       # reconstruction
            pl.BlockSpec((b_blk, num_kp, 2), lambda n: (n, 0, 0)),   # keypoint means
        ),
        compiler_params=pltpu.CompilerParams(
            dimension_semantics=("parallel",),       # shard batch steps across TCs
            vmem_limit_bytes=32 * 1024 * 1024),
    )(src, tgt, gy, gx, params)

    reconstruction = recon_flat.reshape(N, C, H, W)
    return reconstruction, mu_t


# ----------------------------------------------------------------------------
# Transporter module (forward pass, training path i.e. test=False)
# ----------------------------------------------------------------------------
class TransporterPallas:
    def __init__(self, key, in_ch=3, feat_ch=4, num_kp=4, std=0.1):
        self.std = std
        k1, k2, k3, k4, k5, k6 = jax.random.split(key, 6)
        # feature_encoder: 1x1 conv  in_ch -> feat_ch
        self.w_feat = 0.1 * jax.random.normal(k1, (feat_ch, in_ch), jnp.float32)
        self.b_feat = 0.1 * jax.random.normal(k2, (feat_ch,), jnp.float32)
        # point_net: 1x1 conv  in_ch -> num_kp
        self.w_pt = 0.1 * jax.random.normal(k3, (num_kp, in_ch), jnp.float32)
        self.b_pt = 0.1 * jax.random.normal(k4, (num_kp,), jnp.float32)
        # refine_net: 1x1 conv  feat_ch -> in_ch
        self.w_ref = 0.1 * jax.random.normal(k5, (in_ch, feat_ch), jnp.float32)
        self.b_ref = 0.1 * jax.random.normal(k6, (in_ch,), jnp.float32)

    def forward(self, source_images, target_images):
        return transporter_forward(
            source_images, target_images,
            self.w_feat, self.b_feat,
            self.w_pt, self.b_pt,
            self.w_ref, self.b_ref,
            std=self.std)


if __name__ == "__main__":
    key = jax.random.PRNGKey(0)
    k_params, k_src, k_tgt = jax.random.split(key, 3)

    N, C, H, W = 2, 3, 16, 16      # small NCHW images
    source_images = jax.random.normal(k_src, (N, C, H, W), jnp.float32)
    target_images = jax.random.normal(k_tgt, (N, C, H, W), jnp.float32)

    model = TransporterPallas(k_params, in_ch=C, feat_ch=4, num_kp=4, std=0.1)
    reconstruction, mu_t = jax.jit(model.forward)(source_images, target_images)
    jax.block_until_ready((reconstruction, mu_t))

    assert reconstruction.shape == (N, C, H, W)
    assert mu_t.shape == (N, 4, 2)
    assert bool(jnp.all(jnp.isfinite(reconstruction)))
    assert bool(jnp.all((mu_t >= 0.0) & (mu_t <= 1.0)))
    print("KERNEL_OK")
</pallas_src>

<mosaic_0001>
module attributes {stable_mosaic.version = 11 : i64} {
  func.func @_transporter_kernel(%arg0: i32, %arg1: memref<1x3x256xbf16, #tpu.memory_space<vmem>>, %arg2: memref<1x3x256xbf16, #tpu.memory_space<vmem>>, %arg3: memref<1x256xf32, #tpu.memory_space<vmem>>, %arg4: memref<1x256xf32, #tpu.memory_space<vmem>>, %arg5: memref<47xf32, #tpu.memory_space<smem>>, %arg6: memref<1x3x256xf32, #tpu.memory_space<vmem>>, %arg7: memref<1x4x2xf32, #tpu.memory_space<vmem>>) attributes {dimension_semantics = [#tpu.dimension_semantics<parallel>], iteration_bounds = array<i64: 2>, scalar_prefetch = 0 : i64, scratch_operands = 0 : i64, tpu.core_type = #tpu.core_type<tc>, window_params = [{transform_indices = @transform_0, window_bounds = array<i64: 1, 3, 256>}, {transform_indices = @transform_1, window_bounds = array<i64: 1, 3, 256>}, {pipeline_mode = #tpu.pipeline_mode<synchronous>, transform_indices = @transform_2, window_bounds = array<i64: 1, 256>}, {pipeline_mode = #tpu.pipeline_mode<synchronous>, transform_indices = @transform_3, window_bounds = array<i64: 1, 256>}, {transform_indices = @transform_4, window_bounds = array<i64: 47>}, {transform_indices = @transform_5, window_bounds = array<i64: 1, 3, 256>}, {transform_indices = @transform_6, window_bounds = array<i64: 1, 4, 2>}]} {
    %c0 = arith.constant 0 : index
    %c0_0 = arith.constant 0 : index
    %0 = vector.load %arg3[%c0, %c0_0] : memref<1x256xf32, #tpu.memory_space<vmem>>, vector<1x256xf32>
    %c0_1 = arith.constant 0 : index
    %c0_2 = arith.constant 0 : index
    %1 = vector.load %arg4[%c0_1, %c0_2] : memref<1x256xf32, #tpu.memory_space<vmem>>, vector<1x256xf32>
    %c0_3 = arith.constant 0 : index
    %c0_4 = arith.constant 0 : index
    %c0_5 = arith.constant 0 : index
    %2 = vector.load %arg1[%c0_3, %c0_4, %c0_5] : memref<1x3x256xbf16, #tpu.memory_space<vmem>>, vector<1x3x256xbf16>
    %3 = vector.shape_cast %2 : vector<1x3x256xbf16> to vector<3x256xbf16>
    %4 = arith.extf %3 : vector<3x256xbf16> to vector<3x256xf32>
    %c0_6 = arith.constant 0 : index
    %c0_7 = arith.constant 0 : index
    %c0_8 = arith.constant 0 : index
    %5 = vector.load %arg2[%c0_6, %c0_7, %c0_8] : memref<1x3x256xbf16, #tpu.memory_space<vmem>>, vector<1x3x256xbf16>
    %6 = vector.shape_cast %5 : vector<1x3x256xbf16> to vector<3x256xbf16>
    %7 = arith.extf %6 : vector<3x256xbf16> to vector<3x256xf32>
    %c16 = arith.constant 16 : index
    %8 = memref.load %arg5[%c16] : memref<47xf32, #tpu.memory_space<smem>>
    %9 = vector.extract_strided_slice %4 {offsets = [0, 0], sizes = [1, 256], strides = [1, 1]} : vector<3x256xf32> to vector<1x256xf32>
    %10 = vector.broadcast %8 : f32 to vector<1x256xf32>
    %11 = arith.mulf %10, %9 : vector<1x256xf32>
    %c28 = arith.constant 28 : index
    %12 = memref.load %arg5[%c28] : memref<47xf32, #tpu.memory_space<smem>>
    %13 = vector.broadcast %12 : f32 to vector<1x256xf32>
    %14 = arith.addf %11, %13 : vector<1x256xf32>
    %c17 = arith.constant 17 : index
    %15 = memref.load %arg5[%c17] : memref<47xf32, #tpu.memory_space<smem>>
    %16 = vector.extract_strided_slice %4 {offsets = [1, 0], sizes = [1, 256], strides = [1, 1]} : vector<3x256xf32> to vector<1x256xf32>
    %17 = vector.broadcast %15 : f32 to vector<1x256xf32>
    %18 = arith.mulf %17, %16 : vector<1x256xf32>
    %19 = arith.addf %14, %18 : vector<1x256xf32>
    %c18 = arith.constant 18 : index
    %20 = memref.load %arg5[%c18] : memref<47xf32, #tpu.memory_space<smem>>
    %21 = vector.extract_strided_slice %4 {offsets = [2, 0], sizes = [1, 256], strides = [1, 1]} : vector<3x256xf32> to vector<1x256xf32>
    %22 = vector.broadcast %20 : f32 to vector<1x256xf32>
    %23 = arith.mulf %22, %21 : vector<1x256xf32>
    %24 = arith.addf %19, %23 : vector<1x256xf32>
    %c19 = arith.constant 19 : index
    %25 = memref.load %arg5[%c19] : memref<47xf32, #tpu.memory_space<smem>>
    %26 = vector.extract_strided_slice %4 {offsets = [0, 0], sizes = [1, 256], strides = [1, 1]} : vector<3x256xf32> to vector<1x256xf32>
    %27 = vector.broadcast %25 : f32 to vector<1x256xf32>
    %28 = arith.mulf %27, %26 : vector<1x256xf32>
    %c29 = arith.constant 29 : index
    %29 = memref.load %arg5[%c29] : memref<47xf32, #tpu.memory_space<smem>>
    %30 = vector.broadcast %29 : f32 to vector<1x256xf32>
    %31 = arith.addf %28, %30 : vector<1x256xf32>
    %c20 = arith.constant 20 : index
    %32 = memref.load %arg5[%c20] : memref<47xf32, #tpu.memory_space<smem>>
    %33 = vector.extract_strided_slice %4 {offsets = [1, 0], sizes = [1, 256], strides = [1, 1]} : vector<3x256xf32> to vector<1x256xf32>
    %34 = vector.broadcast %32 : f32 to vector<1x256xf32>
    %35 = arith.mulf %34, %33 : vector<1x256xf32>
    %36 = arith.addf %31, %35 : vector<1x256xf32>
    %c21 = arith.constant 21 : index
    %37 = memref.load %arg5[%c21] : memref<47xf32, #tpu.memory_space<smem>>
    %38 = vector.extract_strided_slice %4 {offsets = [2, 0], sizes = [1, 256], strides = [1, 1]} : vector<3x256xf32> to vector<1x256xf32>
    %39 = vector.broadcast %37 : f32 to vector<1x256xf32>
    %40 = arith.mulf %39, %38 : vector<1x256xf32>
    %41 = arith.addf %36, %40 : vector<1x256xf32>
    %c22 = arith.constant 22 : index
    %42 = memref.load %arg5[%c22] : memref<47xf32, #tpu.memory_space<smem>>
    %43 = vector.extract_strided_slice %4 {offsets = [0, 0], sizes = [1, 256], strides = [1, 1]} : vector<3x256xf32> to vector<1x256xf32>
    %44 = vector.broadcast %42 : f32 to vector<1x256xf32>
    %45 = arith.mulf %44, %43 : vector<1x256xf32>
    %c30 = arith.constant 30 : index
    %46 = memref.load %arg5[%c30] : memref<47xf32, #tpu.memory_space<smem>>
    %47 = vector.broadcast %46 : f32 to vector<1x256xf32>
    %48 = arith.addf %45, %47 : vector<1x256xf32>
    %c23 = arith.constant 23 : index
    %49 = memref.load %arg5[%c23] : memref<47xf32, #tpu.memory_space<smem>>
    %50 = vector.extract_strided_slice %4 {offsets = [1, 0], sizes = [1, 256], strides = [1, 1]} : vector<3x256xf32> to vector<1x256xf32>
    %51 = vector.broadcast %49 : f32 to vector<1x256xf32>
    %52 = arith.mulf %51, %50 : vector<1x256xf32>
    %53 = arith.addf %48, %52 : vector<1x256xf32>
    %c24 = arith.constant 24 : index
    %54 = memref.load %arg5[%c24] : memref<47xf32, #tpu.memory_space<smem>>
    %55 = vector.extract_strided_slice %4 {offsets = [2, 0], sizes = [1, 256], strides = [1, 1]} : vector<3x256xf32> to vector<1x256xf32>
    %56 = vector.broadcast %54 : f32 to vector<1x256xf32>
    %57 = arith.mulf %56, %55 : vector<1x256xf32>
    %58 = arith.addf %53, %57 : vector<1x256xf32>
    %c25 = arith.constant 25 : index
    %59 = memref.load %arg5[%c25] : memref<47xf32, #tpu.memory_space<smem>>
    %60 = vector.extract_strided_slice %4 {offsets = [0, 0], sizes = [1, 256], strides = [1, 1]} : vector<3x256xf32> to vector<1x256xf32>
    %61 = vector.broadcast %59 : f32 to vector<1x256xf32>
    %62 = arith.mulf %61, %60 : vector<1x256xf32>
    %c31 = arith.constant 31 : index
    %63 = memref.load %arg5[%c31] : memref<47xf32, #tpu.memory_space<smem>>
    %64 = vector.broadcast %63 : f32 to vector<1x256xf32>
    %65 = arith.addf %62, %64 : vector<1x256xf32>
    %c26 = arith.constant 26 : index
    %66 = memref.load %arg5[%c26] : memref<47xf32, #tpu.memory_space<smem>>
    %67 = vector.extract_strided_slice %4 {offsets = [1, 0], sizes = [1, 256], strides = [1, 1]} : vector<3x256xf32> to vector<1x256xf32>
    %68 = vector.broadcast %66 : f32 to vector<1x256xf32>
    %69 = arith.mulf %68, %67 : vector<1x256xf32>
    %70 = arith.addf %65, %69 : vector<1x256xf32>
    %c27 = arith.constant 27 : index
    %71 = memref.load %arg5[%c27] : memref<47xf32, #tpu.memory_space<smem>>
    %72 = vector.extract_strided_slice %4 {offsets = [2, 0], sizes = [1, 256], strides = [1, 1]} : vector<3x256xf32> to vector<1x256xf32>
    %73 = vector.broadcast %71 : f32 to vector<1x256xf32>
    %74 = arith.mulf %73, %72 : vector<1x256xf32>
    %75 = arith.addf %70, %74 : vector<1x256xf32>
    %c16_9 = arith.constant 16 : index
    %76 = memref.load %arg5[%c16_9] : memref<47xf32, #tpu.memory_space<smem>>
    %77 = vector.extract_strided_slice %7 {offsets = [0, 0], sizes = [1, 256], strides = [1, 1]} : vector<3x256xf32> to vector<1x256xf32>
    %78 = vector.broadcast %76 : f32 to vector<1x256xf32>
    %79 = arith.mulf %78, %77 : vector<1x256xf32>
    %c28_10 = arith.constant 28 : index
    %80 = memref.load %arg5[%c28_10] : memref<47xf32, #tpu.memory_space<smem>>
    %81 = vector.broadcast %80 : f32 to vector<1x256xf32>
    %82 = arith.addf %79, %81 : vector<1x256xf32>
    %c17_11 = arith.constant 17 : index
    %83 = memref.load %arg5[%c17_11] : memref<47xf32, #tpu.memory_space<smem>>
    %84 = vector.extract_strided_slice %7 {offsets = [1, 0], sizes = [1, 256], strides = [1, 1]} : vector<3x256xf32> to vector<1x256xf32>
    %85 = vector.broadcast %83 : f32 to vector<1x256xf32>
    %86 = arith.mulf %85, %84 : vector<1x256xf32>
    %87 = arith.addf %82, %86 : vector<1x256xf32>
    %c18_12 = arith.constant 18 : index
    %88 = memref.load %arg5[%c18_12] : memref<47xf32, #tpu.memory_space<smem>>
    %89 = vector.extract_strided_slice %7 {offsets = [2, 0], sizes = [1, 256], strides = [1, 1]} : vector<3x256xf32> to vector<1x256xf32>
    %90 = vector.broadcast %88 : f32 to vector<1x256xf32>
    %91 = arith.mulf %90, %89 : vector<1x256xf32>
    %92 = arith.addf %87, %91 : vector<1x256xf32>
    %c19_13 = arith.constant 19 : index
    %93 = memref.load %arg5[%c19_13] : memref<47xf32, #tpu.memory_space<smem>>
    %94 = vector.extract_strided_slice %7 {offsets = [0, 0], sizes = [1, 256], strides = [1, 1]} : vector<3x256xf32> to vector<1x256xf32>
    %95 = vector.broadcast %93 : f32 to vector<1x256xf32>
    %96 = arith.mulf %95, %94 : vector<1x256xf32>
    %c29_14 = arith.constant 29 : index
    %97 = memref.load %arg5[%c29_14] : memref<47xf32, #tpu.memory_space<smem>>
    %98 = vector.broadcast %97 : f32 to vector<1x256xf32>
    %99 = arith.addf %96, %98 : vector<1x256xf32>
    %c20_15 = arith.constant 20 : index
    %100 = memref.load %arg5[%c20_15] : memref<47xf32, #tpu.memory_space<smem>>
    %101 = vector.extract_strided_slice %7 {offsets = [1, 0], sizes = [1, 256], strides = [1, 1]} : vector<3x256xf32> to vector<1x256xf32>
    %102 = vector.broadcast %100 : f32 to vector<1x256xf32>
    %103 = arith.mulf %102, %101 : vector<1x256xf32>
    %104 = arith.addf %99, %103 : vector<1x256xf32>
    %c21_16 = arith.constant 21 : index
    %105 = memref.load %arg5[%c21_16] : memref<47xf32, #tpu.memory_space<smem>>
    %106 = vector.extract_strided_slice %7 {offsets = [2, 0], sizes = [1, 256], strides = [1, 1]} : vector<3x256xf32> to vector<1x256xf32>
    %107 = vector.broadcast %105 : f32 to vector<1x256xf32>
    %108 = arith.mulf %107, %106 : vector<1x256xf32>
    %109 = arith.addf %104, %108 : vector<1x256xf32>
    %c22_17 = arith.constant 22 : index
    %110 = memref.load %arg5[%c22_17] : memref<47xf32, #tpu.memory_space<smem>>
    %111 = vector.extract_strided_slice %7 {offsets = [0, 0], sizes = [1, 256], strides = [1, 1]} : vector<3x256xf32> to vector<1x256xf32>
    %112 = vector.broadcast %110 : f32 to vector<1x256xf32>
    %113 = arith.mulf %112, %111 : vector<1x256xf32>
    %c30_18 = arith.constant 30 : index
    %114 = memref.load %arg5[%c30_18] : memref<47xf32, #tpu.memory_space<smem>>
    %115 = vector.broadcast %114 : f32 to vector<1x256xf32>
    %116 = arith.addf %113, %115 : vector<1x256xf32>
    %c23_19 = arith.constant 23 : index
    %117 = memref.load %arg5[%c23_19] : memref<47xf32, #tpu.memory_space<smem>>
    %118 = vector.extract_strided_slice %7 {offsets = [1, 0], sizes = [1, 256], strides = [1, 1]} : vector<3x256xf32> to vector<1x256xf32>
    %119 = vector.broadcast %117 : f32 to vector<1x256xf32>
    %120 = arith.mulf %119, %118 : vector<1x256xf32>
    %121 = arith.addf %116, %120 : vector<1x256xf32>
    %c24_20 = arith.constant 24 : index
    %122 = memref.load %arg5[%c24_20] : memref<47xf32, #tpu.memory_space<smem>>
    %123 = vector.extract_strided_slice %7 {offsets = [2, 0], sizes = [1, 256], strides = [1, 1]} : vector<3x256xf32> to vector<1x256xf32>
    %124 = vector.broadcast %122 : f32 to vector<1x256xf32>
    %125 = arith.mulf %124, %123 : vector<1x256xf32>
    %126 = arith.addf %121, %125 : vector<1x256xf32>
    %c25_21 = arith.constant 25 : index
    %127 = memref.load %arg5[%c25_21] : memref<47xf32, #tpu.memory_space<smem>>
    %128 = vector.extract_strided_slice %7 {offsets = [0, 0], sizes = [1, 256], strides = [1, 1]} : vector<3x256xf32> to vector<1x256xf32>
    %129 = vector.broadcast %127 : f32 to vector<1x256xf32>
    %130 = arith.mulf %129, %128 : vector<1x256xf32>
    %c31_22 = arith.constant 31 : index
    %131 = memref.load %arg5[%c31_22] : memref<47xf32, #tpu.memory_space<smem>>
    %132 = vector.broadcast %131 : f32 to vector<1x256xf32>
    %133 = arith.addf %130, %132 : vector<1x256xf32>
    %c26_23 = arith.constant 26 : index
    %134 = memref.load %arg5[%c26_23] : memref<47xf32, #tpu.memory_space<smem>>
    %135 = vector.extract_strided_slice %7 {offsets = [1, 0], sizes = [1, 256], strides = [1, 1]} : vector<3x256xf32> to vector<1x256xf32>
    %136 = vector.broadcast %134 : f32 to vector<1x256xf32>
    %137 = arith.mulf %136, %135 : vector<1x256xf32>
    %138 = arith.addf %133, %137 : vector<1x256xf32>
    %c27_24 = arith.constant 27 : index
    %139 = memref.load %arg5[%c27_24] : memref<47xf32, #tpu.memory_space<smem>>
    %140 = vector.extract_strided_slice %7 {offsets = [2, 0], sizes = [1, 256], strides = [1, 1]} : vector<3x256xf32> to vector<1x256xf32>
    %141 = vector.broadcast %139 : f32 to vector<1x256xf32>
    %142 = arith.mulf %141, %140 : vector<1x256xf32>
    %143 = arith.addf %138, %142 : vector<1x256xf32>
    %144 = tpu.concatenate %24, %41, %58, %75, %92, %109, %126, %143 in 0 : vector<1x256xf32>, vector<1x256xf32>, vector<1x256xf32>, vector<1x256xf32>, vector<1x256xf32>, vector<1x256xf32>, vector<1x256xf32>, vector<1x256xf32> -> vector<8x256xf32>
    %c0_25 = arith.constant 0 : index
    %145 = memref.load %arg5[%c0_25] : memref<47xf32, #tpu.memory_space<smem>>
    %146 = vector.extract_strided_slice %4 {offsets = [0, 0], sizes = [1, 256], strides = [1, 1]} : vector<3x256xf32> to vector<1x256xf32>
    %147 = vector.broadcast %145 : f32 to vector<1x256xf32>
    %148 = arith.mulf %147, %146 : vector<1x256xf32>
    %c12 = arith.constant 12 : index
    %149 = memref.load %arg5[%c12] : memref<47xf32, #tpu.memory_space<smem>>
    %150 = vector.broadcast %149 : f32 to vector<1x256xf32>
    %151 = arith.addf %148, %150 : vector<1x256xf32>
    %c1 = arith.constant 1 : index
    %152 = memref.load %arg5[%c1] : memref<47xf32, #tpu.memory_space<smem>>
    %153 = vector.extract_strided_slice %4 {offsets = [1, 0], sizes = [1, 256], strides = [1, 1]} : vector<3x256xf32> to vector<1x256xf32>
    %154 = vector.broadcast %152 : f32 to vector<1x256xf32>
    %155 = arith.mulf %154, %153 : vector<1x256xf32>
    %156 = arith.addf %151, %155 : vector<1x256xf32>
    %c2 = arith.constant 2 : index
    %157 = memref.load %arg5[%c2] : memref<47xf32, #tpu.memory_space<smem>>
    %158 = vector.extract_strided_slice %4 {offsets = [2, 0], sizes = [1, 256], strides = [1, 1]} : vector<3x256xf32> to vector<1x256xf32>
    %159 = vector.broadcast %157 : f32 to vector<1x256xf32>
    %160 = arith.mulf %159, %158 : vector<1x256xf32>
    %161 = arith.addf %156, %160 : vector<1x256xf32>
    %c3 = arith.constant 3 : index
    %162 = memref.load %arg5[%c3] : memref<47xf32, #tpu.memory_space<smem>>
    %163 = vector.extract_strided_slice %4 {offsets = [0, 0], sizes = [1, 256], strides = [1, 1]} : vector<3x256xf32> to vector<1x256xf32>
    %164 = vector.broadcast %162 : f32 to vector<1x256xf32>
    %165 = arith.mulf %164, %163 : vector<1x256xf32>
    %c13 = arith.constant 13 : index
    %166 = memref.load %arg5[%c13] : memref<47xf32, #tpu.memory_space<smem>>
    %167 = vector.broadcast %166 : f32 to vector<1x256xf32>
    %168 = arith.addf %165, %167 : vector<1x256xf32>
    %c4 = arith.constant 4 : index
    %169 = memref.load %arg5[%c4] : memref<47xf32, #tpu.memory_space<smem>>
    %170 = vector.extract_strided_slice %4 {offsets = [1, 0], sizes = [1, 256], strides = [1, 1]} : vector<3x256xf32> to vector<1x256xf32>
    %171 = vector.broadcast %169 : f32 to vector<1x256xf32>
    %172 = arith.mulf %171, %170 : vector<1x256xf32>
    %173 = arith.addf %168, %172 : vector<1x256xf32>
    %c5 = arith.constant 5 : index
    %174 = memref.load %arg5[%c5] : memref<47xf32, #tpu.memory_space<smem>>
    %175 = vector.extract_strided_slice %4 {offsets = [2, 0], sizes = [1, 256], strides = [1, 1]} : vector<3x256xf32> to vector<1x256xf32>
    %176 = vector.broadcast %174 : f32 to vector<1x256xf32>
    %177 = arith.mulf %176, %175 : vector<1x256xf32>
    %178 = arith.addf %173, %177 : vector<1x256xf32>
    %c6 = arith.constant 6 : index
    %179 = memref.load %arg5[%c6] : memref<47xf32, #tpu.memory_space<smem>>
    %180 = vector.extract_strided_slice %4 {offsets = [0, 0], sizes = [1, 256], strides = [1, 1]} : vector<3x256xf32> to vector<1x256xf32>
    %181 = vector.broadcast %179 : f32 to vector<1x256xf32>
    %182 = arith.mulf %181, %180 : vector<1x256xf32>
    %c14 = arith.constant 14 : index
    %183 = memref.load %arg5[%c14] : memref<47xf32, #tpu.memory_space<smem>>
    %184 = vector.broadcast %183 : f32 to vector<1x256xf32>
    %185 = arith.addf %182, %184 : vector<1x256xf32>
    %c7 = arith.constant 7 : index
    %186 = memref.load %arg5[%c7] : memref<47xf32, #tpu.memory_space<smem>>
    %187 = vector.extract_strided_slice %4 {offsets = [1, 0], sizes = [1, 256], strides = [1, 1]} : vector<3x256xf32> to vector<1x256xf32>
    %188 = vector.broadcast %186 : f32 to vector<1x256xf32>
    %189 = arith.mulf %188, %187 : vector<1x256xf32>
    %190 = arith.addf %185, %189 : vector<1x256xf32>
    %c8 = arith.constant 8 : index
    %191 = memref.load %arg5[%c8] : memref<47xf32, #tpu.memory_space<smem>>
    %192 = vector.extract_strided_slice %4 {offsets = [2, 0], sizes = [1, 256], strides = [1, 1]} : vector<3x256xf32> to vector<1x256xf32>
    %193 = vector.broadcast %191 : f32 to vector<1x256xf32>
    %194 = arith.mulf %193, %192 : vector<1x256xf32>
    %195 = arith.addf %190, %194 : vector<1x256xf32>
    %c9 = arith.constant 9 : index
    %196 = memref.load %arg5[%c9] : memref<47xf32, #tpu.memory_space<smem>>
    %197 = vector.extract_strided_slice %4 {offsets = [0, 0], sizes = [1, 256], strides = [1, 1]} : vector<3x256xf32> to vector<1x256xf32>
    %198 = vector.broadcast %196 : f32 to vector<1x256xf32>
    %199 = arith.mulf %198, %197 : vector<1x256xf32>
    %c15 = arith.constant 15 : index
    %200 = memref.load %arg5[%c15] : memref<47xf32, #tpu.memory_space<smem>>
    %201 = vector.broadcast %200 : f32 to vector<1x256xf32>
    %202 = arith.addf %199, %201 : vector<1x256xf32>
    %c10 = arith.constant 10 : index
    %203 = memref.load %arg5[%c10] : memref<47xf32, #tpu.memory_space<smem>>
    %204 = vector.extract_strided_slice %4 {offsets = [1, 0], sizes = [1, 256], strides = [1, 1]} : vector<3x256xf32> to vector<1x256xf32>
    %205 = vector.broadcast %203 : f32 to vector<1x256xf32>
    %206 = arith.mulf %205, %204 : vector<1x256xf32>
    %207 = arith.addf %202, %206 : vector<1x256xf32>
    %c11 = arith.constant 11 : index
    %208 = memref.load %arg5[%c11] : memref<47xf32, #tpu.memory_space<smem>>
    %209 = vector.extract_strided_slice %4 {offsets = [2, 0], sizes = [1, 256], strides = [1, 1]} : vector<3x256xf32> to vector<1x256xf32>
    %210 = vector.broadcast %208 : f32 to vector<1x256xf32>
    %211 = arith.mulf %210, %209 : vector<1x256xf32>
    %212 = arith.addf %207, %211 : vector<1x256xf32>
    %c0_26 = arith.constant 0 : index
    %213 = memref.load %arg5[%c0_26] : memref<47xf32, #tpu.memory_space<smem>>
    %214 = vector.extract_strided_slice %7 {offsets = [0, 0], sizes = [1, 256], strides = [1, 1]} : vector<3x256xf32> to vector<1x256xf32>
    %215 = vector.broadcast %213 : f32 to vector<1x256xf32>
    %216 = arith.mulf %215, %214 : vector<1x256xf32>
    %c12_27 = arith.constant 12 : index
    %217 = memref.load %arg5[%c12_27] : memref<47xf32, #tpu.memory_space<smem>>
    %218 = vector.broadcast %217 : f32 to vector<1x256xf32>
    %219 = arith.addf %216, %218 : vector<1x256xf32>
    %c1_28 = arith.constant 1 : index
    %220 = memref.load %arg5[%c1_28] : memref<47xf32, #tpu.memory_space<smem>>
    %221 = vector.extract_strided_slice %7 {offsets = [1, 0], sizes = [1, 256], strides = [1, 1]} : vector<3x256xf32> to vector<1x256xf32>
    %222 = vector.broadcast %220 : f32 to vector<1x256xf32>
    %223 = arith.mulf %222, %221 : vector<1x256xf32>
    %224 = arith.addf %219, %223 : vector<1x256xf32>
    %c2_29 = arith.constant 2 : index
    %225 = memref.load %arg5[%c2_29] : memref<47xf32, #tpu.memory_space<smem>>
    %226 = vector.extract_strided_slice %7 {offsets = [2, 0], sizes = [1, 256], strides = [1, 1]} : vector<3x256xf32> to vector<1x256xf32>
    %227 = vector.broadcast %225 : f32 to vector<1x256xf32>
    %228 = arith.mulf %227, %226 : vector<1x256xf32>
    %229 = arith.addf %224, %228 : vector<1x256xf32>
    %c3_30 = arith.constant 3 : index
    %230 = memref.load %arg5[%c3_30] : memref<47xf32, #tpu.memory_space<smem>>
    %231 = vector.extract_strided_slice %7 {offsets = [0, 0], sizes = [1, 256], strides = [1, 1]} : vector<3x256xf32> to vector<1x256xf32>
    %232 = vector.broadcast %230 : f32 to vector<1x256xf32>
    %233 = arith.mulf %232, %231 : vector<1x256xf32>
    %c13_31 = arith.constant 13 : index
    %234 = memref.load %arg5[%c13_31] : memref<47xf32, #tpu.memory_space<smem>>
    %235 = vector.broadcast %234 : f32 to vector<1x256xf32>
    %236 = arith.addf %233, %235 : vector<1x256xf32>
    %c4_32 = arith.constant 4 : index
    %237 = memref.load %arg5[%c4_32] : memref<47xf32, #tpu.memory_space<smem>>
    %238 = vector.extract_strided_slice %7 {offsets = [1, 0], sizes = [1, 256], strides = [1, 1]} : vector<3x256xf32> to vector<1x256xf32>
    %239 = vector.broadcast %237 : f32 to vector<1x256xf32>
    %240 = arith.mulf %239, %238 : vector<1x256xf32>
    %241 = arith.addf %236, %240 : vector<1x256xf32>
    %c5_33 = arith.constant 5 : index
    %242 = memref.load %arg5[%c5_33] : memref<47xf32, #tpu.memory_space<smem>>
    %243 = vector.extract_strided_slice %7 {offsets = [2, 0], sizes = [1, 256], strides = [1, 1]} : vector<3x256xf32> to vector<1x256xf32>
    %244 = vector.broadcast %242 : f32 to vector<1x256xf32>
    %245 = arith.mulf %244, %243 : vector<1x256xf32>
    %246 = arith.addf %241, %245 : vector<1x256xf32>
    %c6_34 = arith.constant 6 : index
    %247 = memref.load %arg5[%c6_34] : memref<47xf32, #tpu.memory_space<smem>>
    %248 = vector.extract_strided_slice %7 {offsets = [0, 0], sizes = [1, 256], strides = [1, 1]} : vector<3x256xf32> to vector<1x256xf32>
    %249 = vector.broadcast %247 : f32 to vector<1x256xf32>
    %250 = arith.mulf %249, %248 : vector<1x256xf32>
    %c14_35 = arith.constant 14 : index
    %251 = memref.load %arg5[%c14_35] : memref<47xf32, #tpu.memory_space<smem>>
    %252 = vector.broadcast %251 : f32 to vector<1x256xf32>
    %253 = arith.addf %250, %252 : vector<1x256xf32>
    %c7_36 = arith.constant 7 : index
    %254 = memref.load %arg5[%c7_36] : memref<47xf32, #tpu.memory_space<smem>>
    %255 = vector.extract_strided_slice %7 {offsets = [1, 0], sizes = [1, 256], strides = [1, 1]} : vector<3x256xf32> to vector<1x256xf32>
    %256 = vector.broadcast %254 : f32 to vector<1x256xf32>
    %257 = arith.mulf %256, %255 : vector<1x256xf32>
    %258 = arith.addf %253, %257 : vector<1x256xf32>
    %c8_37 = arith.constant 8 : index
    %259 = memref.load %arg5[%c8_37] : memref<47xf32, #tpu.memory_space<smem>>
    %260 = vector.extract_strided_slice %7 {offsets = [2, 0], sizes = [1, 256], strides = [1, 1]} : vector<3x256xf32> to vector<1x256xf32>
    %261 = vector.broadcast %259 : f32 to vector<1x256xf32>
    %262 = arith.mulf %261, %260 : vector<1x256xf32>
    %263 = arith.addf %258, %262 : vector<1x256xf32>
    %c9_38 = arith.constant 9 : index
    %264 = memref.load %arg5[%c9_38] : memref<47xf32, #tpu.memory_space<smem>>
    %265 = vector.extract_strided_slice %7 {offsets = [0, 0], sizes = [1, 256], strides = [1, 1]} : vector<3x256xf32> to vector<1x256xf32>
    %266 = vector.broadcast %264 : f32 to vector<1x256xf32>
    %267 = arith.mulf %266, %265 : vector<1x256xf32>
    %c15_39 = arith.constant 15 : index
    %268 = memref.load %arg5[%c15_39] : memref<47xf32, #tpu.memory_space<smem>>
    %269 = vector.broadcast %268 : f32 to vector<1x256xf32>
    %270 = arith.addf %267, %269 : vector<1x256xf32>
    %c10_40 = arith.constant 10 : index
    %271 = memref.load %arg5[%c10_40] : memref<47xf32, #tpu.memory_space<smem>>
    %272 = vector.extract_strided_slice %7 {offsets = [1, 0], sizes = [1, 256], strides = [1, 1]} : vector<3x256xf32> to vector<1x256xf32>
    %273 = vector.broadcast %271 : f32 to vector<1x256xf32>
    %274 = arith.mulf %273, %272 : vector<1x256xf32>
    %275 = arith.addf %270, %274 : vector<1x256xf32>
    %c11_41 = arith.constant 11 : index
    %276 = memref.load %arg5[%c11_41] : memref<47xf32, #tpu.memory_space<smem>>
    %277 = vector.extract_strided_slice %7 {offsets = [2, 0], sizes = [1, 256], strides = [1, 1]} : vector<3x256xf32> to vector<1x256xf32>
    %278 = vector.broadcast %276 : f32 to vector<1x256xf32>
    %279 = arith.mulf %278, %277 : vector<1x256xf32>
    %280 = arith.addf %275, %279 : vector<1x256xf32>
    %281 = tpu.concatenate %161, %178, %195, %212, %229, %246, %263, %280 in 0 : vector<1x256xf32>, vector<1x256xf32>, vector<1x256xf32>, vector<1x256xf32>, vector<1x256xf32>, vector<1x256xf32>, vector<1x256xf32>, vector<1x256xf32> -> vector<8x256xf32>
    %cst = arith.constant dense<0xFF800000> : vector<8xf32>
    %282 = vector.multi_reduction <maximumf>, %144, %cst [1] : vector<8x256xf32> to vector<8xf32>
    %283 = vector.shape_cast %282 : vector<8xf32> to vector<8x1xf32>
    %284 = vector.broadcast %283 : vector<8x1xf32> to vector<8x256xf32>
    %285 = arith.subf %144, %284 : vector<8x256xf32>
    %286 = math.exp %285 : vector<8x256xf32>
    %cst_42 = arith.constant dense<0.000000e+00> : vector<8xf32>
    %287 = vector.multi_reduction <add>, %286, %cst_42 [1] : vector<8x256xf32> to vector<8xf32>
    %288 = vector.shape_cast %287 : vector<8xf32> to vector<8x1xf32>
    %cst_43 = arith.constant 1.000000e+00 : f32
    %289 = vector.broadcast %cst_43 : f32 to vector<8x1xf32>
    %290 = arith.divf %289, %288 : vector<8x1xf32>
    %291 = vector.broadcast %0 : vector<1x256xf32> to vector<8x256xf32>
    %292 = arith.mulf %286, %291 : vector<8x256xf32>
    %cst_44 = arith.constant dense<0.000000e+00> : vector<8xf32>
    %293 = vector.multi_reduction <add>, %292, %cst_44 [1] : vector<8x256xf32> to vector<8xf32>
    %294 = vector.shape_cast %293 : vector<8xf32> to vector<8x1xf32>
    %295 = arith.mulf %294, %290 : vector<8x1xf32>
    %296 = vector.broadcast %1 : vector<1x256xf32> to vector<8x256xf32>
    %297 = arith.mulf %286, %296 : vector<8x256xf32>
    %cst_45 = arith.constant dense<0.000000e+00> : vector<8xf32>
    %298 = vector.multi_reduction <add>, %297, %cst_45 [1] : vector<8x256xf32> to vector<8xf32>
    %299 = vector.shape_cast %298 : vector<8xf32> to vector<8x1xf32>
    %300 = arith.mulf %299, %290 : vector<8x1xf32>
    %301 = vector.broadcast %0 : vector<1x256xf32> to vector<8x256xf32>
    %302 = vector.broadcast %295 : vector<8x1xf32> to vector<8x256xf32>
    %303 = arith.subf %301, %302 : vector<8x256xf32>
    %304 = arith.mulf %303, %303 : vector<8x256xf32>
    %305 = vector.broadcast %1 : vector<1x256xf32> to vector<8x256xf32>
    %306 = vector.broadcast %300 : vector<8x1xf32> to vector<8x256xf32>
    %307 = arith.subf %305, %306 : vector<8x256xf32>
    %308 = arith.mulf %307, %307 : vector<8x256xf32>
    %309 = arith.addf %304, %308 : vector<8x256xf32>
    %cst_46 = arith.constant 1.000000e+02 : f32
    %310 = vector.broadcast %cst_46 : f32 to vector<8x256xf32>
    %311 = arith.mulf %309, %310 : vector<8x256xf32>
    %cst_47 = arith.constant 0.000000e+00 : f32
    %312 = vector.broadcast %cst_47 : f32 to vector<8x256xf32>
    %313 = arith.subf %312, %311 : vector<8x256xf32>
    %314 = math.exp %313 : vector<8x256xf32>
    %315 = vector.extract_strided_slice %281 {offsets = [0, 0], sizes = [4, 256], strides = [1, 1]} : vector<8x256xf32> to vector<4x256xf32>
    %316 = vector.extract_strided_slice %281 {offsets = [4, 0], sizes = [4, 256], strides = [1, 1]} : vector<8x256xf32> to vector<4x256xf32>
    %317 = vector.extract_strided_slice %314 {offsets = [4, 0], sizes = [4, 256], strides = [1, 1]} : vector<8x256xf32> to vector<4x256xf32>
    %cst_48 = arith.constant 1.000000e+00 : f32
    %318 = vector.broadcast %cst_48 : f32 to vector<8x256xf32>
    %319 = arith.subf %318, %314 : vector<8x256xf32>
    %320 = vector.extract_strided_slice %319 {offsets = [0, 0], sizes = [4, 256], strides = [1, 1]} : vector<8x256xf32> to vector<4x256xf32>
    %321 = vector.extract_strided_slice %319 {offsets = [4, 0], sizes = [4, 256], strides = [1, 1]} : vector<8x256xf32> to vector<4x256xf32>
    %322 = arith.mulf %320, %321 : vector<4x256xf32>
    %323 = vector.extract_strided_slice %317 {offsets = [0, 0], sizes = [1, 256], strides = [1, 1]} : vector<4x256xf32> to vector<1x256xf32>
    %324 = vector.broadcast %323 : vector<1x256xf32> to vector<4x256xf32>
    %325 = arith.mulf %324, %316 : vector<4x256xf32>
    %326 = vector.extract_strided_slice %317 {offsets = [1, 0], sizes = [1, 256], strides = [1, 1]} : vector<4x256xf32> to vector<1x256xf32>
    %327 = vector.broadcast %326 : vector<1x256xf32> to vector<4x256xf32>
    %328 = arith.mulf %327, %316 : vector<4x256xf32>
    %329 = vector.extract_strided_slice %317 {offsets = [2, 0], sizes = [1, 256], strides = [1, 1]} : vector<4x256xf32> to vector<1x256xf32>
    %330 = vector.broadcast %329 : vector<1x256xf32> to vector<4x256xf32>
    %331 = arith.mulf %330, %316 : vector<4x256xf32>
    %332 = vector.extract_strided_slice %317 {offsets = [3, 0], sizes = [1, 256], strides = [1, 1]} : vector<4x256xf32> to vector<1x256xf32>
    %333 = vector.broadcast %332 : vector<1x256xf32> to vector<4x256xf32>
    %334 = arith.mulf %333, %316 : vector<4x256xf32>
    %335 = vector.extract_strided_slice %322 {offsets = [0, 0], sizes = [1, 256], strides = [1, 1]} : vector<4x256xf32> to vector<1x256xf32>
    %336 = vector.broadcast %335 : vector<1x256xf32> to vector<4x256xf32>
    %337 = arith.mulf %336, %315 : vector<4x256xf32>
    %338 = arith.addf %337, %325 : vector<4x256xf32>
    %339 = vector.extract_strided_slice %322 {offsets = [1, 0], sizes = [1, 256], strides = [1, 1]} : vector<4x256xf32> to vector<1x256xf32>
    %340 = vector.broadcast %339 : vector<1x256xf32> to vector<4x256xf32>
    %341 = arith.mulf %340, %338 : vector<4x256xf32>
    %342 = arith.addf %341, %328 : vector<4x256xf32>
    %343 = vector.extract_strided_slice %322 {offsets = [2, 0], sizes = [1, 256], strides = [1, 1]} : vector<4x256xf32> to vector<1x256xf32>
    %344 = vector.broadcast %343 : vector<1x256xf32> to vector<4x256xf32>
    %345 = arith.mulf %344, %342 : vector<4x256xf32>
    %346 = arith.addf %345, %331 : vector<4x256xf32>
    %347 = vector.extract_strided_slice %322 {offsets = [3, 0], sizes = [1, 256], strides = [1, 1]} : vector<4x256xf32> to vector<1x256xf32>
    %348 = vector.broadcast %347 : vector<1x256xf32> to vector<4x256xf32>
    %349 = arith.mulf %348, %346 : vector<4x256xf32>
    %350 = arith.addf %349, %334 : vector<4x256xf32>
    %c32 = arith.constant 32 : index
    %351 = memref.load %arg5[%c32] : memref<47xf32, #tpu.memory_space<smem>>
    %352 = vector.extract_strided_slice %350 {offsets = [0, 0], sizes = [1, 256], strides = [1, 1]} : vector<4x256xf32> to vector<1x256xf32>
    %353 = vector.broadcast %351 : f32 to vector<1x256xf32>
    %354 = arith.mulf %353, %352 : vector<1x256xf32>
    %c44 = arith.constant 44 : index
    %355 = memref.load %arg5[%c44] : memref<47xf32, #tpu.memory_space<smem>>
    %356 = vector.broadcast %355 : f32 to vector<1x256xf32>
    %357 = arith.addf %354, %356 : vector<1x256xf32>
    %c33 = arith.constant 33 : index
    %358 = memref.load %arg5[%c33] : memref<47xf32, #tpu.memory_space<smem>>
    %359 = vector.extract_strided_slice %350 {offsets = [1, 0], sizes = [1, 256], strides = [1, 1]} : vector<4x256xf32> to vector<1x256xf32>
    %360 = vector.broadcast %358 : f32 to vector<1x256xf32>
    %361 = arith.mulf %360, %359 : vector<1x256xf32>
    %362 = arith.addf %357, %361 : vector<1x256xf32>
    %c34 = arith.constant 34 : index
    %363 = memref.load %arg5[%c34] : memref<47xf32, #tpu.memory_space<smem>>
    %364 = vector.extract_strided_slice %350 {offsets = [2, 0], sizes = [1, 256], strides = [1, 1]} : vector<4x256xf32> to vector<1x256xf32>
    %365 = vector.broadcast %363 : f32 to vector<1x256xf32>
    %366 = arith.mulf %365, %364 : vector<1x256xf32>
    %367 = arith.addf %362, %366 : vector<1x256xf32>
    %c35 = arith.constant 35 : index
    %368 = memref.load %arg5[%c35] : memref<47xf32, #tpu.memory_space<smem>>
    %369 = vector.extract_strided_slice %350 {offsets = [3, 0], sizes = [1, 256], strides = [1, 1]} : vector<4x256xf32> to vector<1x256xf32>
    %370 = vector.broadcast %368 : f32 to vector<1x256xf32>
    %371 = arith.mulf %370, %369 : vector<1x256xf32>
    %372 = arith.addf %367, %371 : vector<1x256xf32>
    %c36 = arith.constant 36 : index
    %373 = memref.load %arg5[%c36] : memref<47xf32, #tpu.memory_space<smem>>
    %374 = vector.extract_strided_slice %350 {offsets = [0, 0], sizes = [1, 256], strides = [1, 1]} : vector<4x256xf32> to vector<1x256xf32>
    %375 = vector.broadcast %373 : f32 to vector<1x256xf32>
    %376 = arith.mulf %375, %374 : vector<1x256xf32>
    %c45 = arith.constant 45 : index
    %377 = memref.load %arg5[%c45] : memref<47xf32, #tpu.memory_space<smem>>
    %378 = vector.broadcast %377 : f32 to vector<1x256xf32>
    %379 = arith.addf %376, %378 : vector<1x256xf32>
    %c37 = arith.constant 37 : index
    %380 = memref.load %arg5[%c37] : memref<47xf32, #tpu.memory_space<smem>>
    %381 = vector.extract_strided_slice %350 {offsets = [1, 0], sizes = [1, 256], strides = [1, 1]} : vector<4x256xf32> to vector<1x256xf32>
    %382 = vector.broadcast %380 : f32 to vector<1x256xf32>
    %383 = arith.mulf %382, %381 : vector<1x256xf32>
    %384 = arith.addf %379, %383 : vector<1x256xf32>
    %c38 = arith.constant 38 : index
    %385 = memref.load %arg5[%c38] : memref<47xf32, #tpu.memory_space<smem>>
    %386 = vector.extract_strided_slice %350 {offsets = [2, 0], sizes = [1, 256], strides = [1, 1]} : vector<4x256xf32> to vector<1x256xf32>
    %387 = vector.broadcast %385 : f32 to vector<1x256xf32>
    %388 = arith.mulf %387, %386 : vector<1x256xf32>
    %389 = arith.addf %384, %388 : vector<1x256xf32>
    %c39 = arith.constant 39 : index
    %390 = memref.load %arg5[%c39] : memref<47xf32, #tpu.memory_space<smem>>
    %391 = vector.extract_strided_slice %350 {offsets = [3, 0], sizes = [1, 256], strides = [1, 1]} : vector<4x256xf32> to vector<1x256xf32>
    %392 = vector.broadcast %390 : f32 to vector<1x256xf32>
    %393 = arith.mulf %392, %391 : vector<1x256xf32>
    %394 = arith.addf %389, %393 : vector<1x256xf32>
    %c40 = arith.constant 40 : index
    %395 = memref.load %arg5[%c40] : memref<47xf32, #tpu.memory_space<smem>>
    %396 = vector.extract_strided_slice %350 {offsets = [0, 0], sizes = [1, 256], strides = [1, 1]} : vector<4x256xf32> to vector<1x256xf32>
    %397 = vector.broadcast %395 : f32 to vector<1x256xf32>
    %398 = arith.mulf %397, %396 : vector<1x256xf32>
    %c46 = arith.constant 46 : index
    %399 = memref.load %arg5[%c46] : memref<47xf32, #tpu.memory_space<smem>>
    %400 = vector.broadcast %399 : f32 to vector<1x256xf32>
    %401 = arith.addf %398, %400 : vector<1x256xf32>
    %c41 = arith.constant 41 : index
    %402 = memref.load %arg5[%c41] : memref<47xf32, #tpu.memory_space<smem>>
    %403 = vector.extract_strided_slice %350 {offsets = [1, 0], sizes = [1, 256], strides = [1, 1]} : vector<4x256xf32> to vector<1x256xf32>
    %404 = vector.broadcast %402 : f32 to vector<1x256xf32>
    %405 = arith.mulf %404, %403 : vector<1x256xf32>
    %406 = arith.addf %401, %405 : vector<1x256xf32>
    %c42 = arith.constant 42 : index
    %407 = memref.load %arg5[%c42] : memref<47xf32, #tpu.memory_space<smem>>
    %408 = vector.extract_strided_slice %350 {offsets = [2, 0], sizes = [1, 256], strides = [1, 1]} : vector<4x256xf32> to vector<1x256xf32>
    %409 = vector.broadcast %407 : f32 to vector<1x256xf32>
    %410 = arith.mulf %409, %408 : vector<1x256xf32>
    %411 = arith.addf %406, %410 : vector<1x256xf32>
    %c43 = arith.constant 43 : index
    %412 = memref.load %arg5[%c43] : memref<47xf32, #tpu.memory_space<smem>>
    %413 = vector.extract_strided_slice %350 {offsets = [3, 0], sizes = [1, 256], strides = [1, 1]} : vector<4x256xf32> to vector<1x256xf32>
    %414 = vector.broadcast %412 : f32 to vector<1x256xf32>
    %415 = arith.mulf %414, %413 : vector<1x256xf32>
    %416 = arith.addf %411, %415 : vector<1x256xf32>
    %417 = tpu.concatenate %372, %394, %416 in 0 : vector<1x256xf32>, vector<1x256xf32>, vector<1x256xf32> -> vector<3x256xf32>
    %c0_49 = arith.constant 0 : index
    %c0_50 = arith.constant 0 : index
    %c0_51 = arith.constant 0 : index
    %418 = vector.load %arg6[%c0_49, %c0_50, %c0_51] : memref<1x3x256xf32, #tpu.memory_space<vmem>>, vector<1x3x256xf32>
    %419 = vector.shape_cast %418 : vector<1x3x256xf32> to vector<3x256xf32>
    %420 = vector.shape_cast %417 : vector<3x256xf32> to vector<1x3x256xf32>
    tpu.vector_store %arg6[%c0_49, %c0_50, %c0_51], %420 {strides = array<i32>} : memref<1x3x256xf32, #tpu.memory_space<vmem>>, vector<1x3x256xf32>,
    %421 = vector.extract_strided_slice %295 {offsets = [0, 0], sizes = [4, 1], strides = [1, 1]} : vector<8x1xf32> to vector<4x1xf32>
    %cst_52 = arith.constant 1.000000e+00 : f32
    %422 = vector.broadcast %cst_52 : f32 to vector<4x1xf32>
    %423 = arith.addf %421, %422 : vector<4x1xf32>
    %cst_53 = arith.constant 5.000000e-01 : f32
    %424 = vector.broadcast %cst_53 : f32 to vector<4x1xf32>
    %425 = arith.mulf %423, %424 : vector<4x1xf32>
    %426 = vector.extract_strided_slice %300 {offsets = [0, 0], sizes = [4, 1], strides = [1, 1]} : vector<8x1xf32> to vector<4x1xf32>
    %cst_54 = arith.constant 1.000000e+00 : f32
    %427 = vector.broadcast %cst_54 : f32 to vector<4x1xf32>
    %428 = arith.addf %426, %427 : vector<4x1xf32>
    %cst_55 = arith.constant 5.000000e-01 : f32
    %429 = vector.broadcast %cst_55 : f32 to vector<4x1xf32>
    %430 = arith.mulf %428, %429 : vector<4x1xf32>
    %431 = tpu.iota {dimensions = array<i32: 1>} : vector<4x2xi32>
    %c0_i32 = arith.constant 0 : i32
    %432 = vector.broadcast %c0_i32 : i32 to vector<4x2xi32>
    %433 = arith.cmpi eq, %431, %432 : vector<4x2xi32>
    %434 = vector.shape_cast %425 : vector<4x1xf32> to vector<4x1xf32>
    %435 = vector.broadcast %434 : vector<4x1xf32> to vector<4x2xf32>
    %436 = vector.shape_cast %430 : vector<4x1xf32> to vector<4x1xf32>
    %437 = vector.broadcast %436 : vector<4x1xf32> to vector<4x2xf32>
    %438 = arith.select %433, %435, %437 : vector<4x2xi1>, vector<4x2xf32>
    %c0_56 = arith.constant 0 : index
    %c0_57 = arith.constant 0 : index
    %c0_58 = arith.constant 0 : index
    %439 = vector.load %arg7[%c0_56, %c0_57, %c0_58] : memref<1x4x2xf32, #tpu.memory_space<vmem>>, vector<1x4x2xf32>
    %440 = vector.shape_cast %439 : vector<1x4x2xf32> to vector<4x2xf32>
    %441 = vector.shape_cast %438 : vector<4x2xf32> to vector<1x4x2xf32>
    tpu.vector_store %arg7[%c0_56, %c0_57, %c0_58], %441 {strides = array<i32>} : memref<1x4x2xf32, #tpu.memory_space<vmem>>, vector<1x4x2xf32>,
    return
  }
  func.func @transform_0(%arg0: i32) -> (i32, i32, i32) {
    %c0_i32 = arith.constant 0 : i32
    %c0_i32_0 = arith.constant 0 : i32
    %c0_i32_1 = arith.constant 0 : i32
    return %arg0, %c0_i32, %c0_i32_0 : i32, i32, i32
  }
  func.func @transform_1(%arg0: i32) -> (i32, i32, i32) {
    %c0_i32 = arith.constant 0 : i32
    %c0_i32_0 = arith.constant 0 : i32
    %c0_i32_1 = arith.constant 0 : i32
    return %arg0, %c0_i32, %c0_i32_0 : i32, i32, i32
  }
  func.func @transform_2(%arg0: i32) -> (i32, i32) {
    %c0_i32 = arith.constant 0 : i32
    %c0_i32_0 = arith.constant 0 : i32
    %c0_i32_1 = arith.constant 0 : i32
    return %c0_i32, %c0_i32_0 : i32, i32
  }
  func.func @transform_3(%arg0: i32) -> (i32, i32) {
    %c0_i32 = arith.constant 0 : i32
    %c0_i32_0 = arith.constant 0 : i32
    %c0_i32_1 = arith.constant 0 : i32
    return %c0_i32, %c0_i32_0 : i32, i32
  }
  func.func @transform_4(%arg0: i32) -> i32 {
    %c0_i32 = arith.constant 0 : i32
    %c0_i32_0 = arith.constant 0 : i32
    return %c0_i32 : i32
  }
  func.func @transform_5(%arg0: i32) -> (i32, i32, i32) {
    %c0_i32 = arith.constant 0 : i32
    %c0_i32_0 = arith.constant 0 : i32
    %c0_i32_1 = arith.constant 0 : i32
    return %arg0, %c0_i32, %c0_i32_0 : i32, i32, i32
  }
  func.func @transform_6(%arg0: i32) -> (i32, i32, i32) {
    %c0_i32 = arith.constant 0 : i32
    %c0_i32_0 = arith.constant 0 : i32
    %c0_i32_1 = arith.constant 0 : i32
    return %arg0, %c0_i32, %c0_i32_0 : i32, i32, i32
  }
}

</mosaic_0001>

<llo_original>
// kernel: forward.1
$region0: #{forward.1}
  #allocation0 [shape = 'u32[]', space=smem, size = 0x4, offset = 0x4, fixed_abs, tag = 'smem constant byte address 0x4 - core index']
  #allocation1 [shape = 'u32[144,128]{1,0:T(1,128)}', space=vmem, size = 0x12000, scoped, tag = 'internal scratch']
  %s0 = inlined_call_operand.vmem [shape: bf16[2,3,256], index: 0, kind: input, shape index: {}]
  %s1 = inlined_call_operand.vmem [shape: bf16[2,3,256], index: 1, kind: input, shape index: {}]
  %s2 = inlined_call_operand.vmem [shape: f32[1,256], index: 2, kind: input, shape index: {}]
  %s3 = inlined_call_operand.vmem [shape: f32[1,256], index: 3, kind: input, shape index: {}]
  %s4 = inlined_call_operand.vmem [shape: f32[47], index: 4, kind: input, shape index: {}]
  %s5 = inlined_call_operand.vmem [shape: f32[2,3,256], index: 5, kind: output, shape index: {0}]
  %s6 = inlined_call_operand.vmem [shape: f32[2,4,2], index: 6, kind: output, shape index: {1}]
  %7 = xla_tuple %s5, %s6
  %s8 = sld [smem:[#allocation0]]
  $region65: #{forward.1} parent=0
    _
  %s10 = ssub.s32 1, %s8
  %s11 = scalar_select 0, %s10, %s8
  $region1: #{forward.1} parent=0
    #allocation2 [shape = 'u8[512]{0}', space=smem, size = 0x200, scoped, tag = 'input window, operand 4, single buffered']
    #allocation3 [shape = 's32[2]{0}', space=sflag, size = 0x8, scoped, tag = 'scoped memory for forward.1']
    %12 = vsyncpa [#allocation3], 0
    loop: start=0, step=1, limit=4
    $region2: #{forward.1} parent=1 // loop_pre_header
      _
    $region3: #{forward.1} parent=1 // loop_header
      %s14 = sphi 0, %s18
      %p15 = scmp.ge.s32.totalorder %s14, 4
      %s24 = sphi 0, %s26
      %s27 = sphi 0, %s24
      %s28 = sphi 0, %s27
      %s44 = sphi 0, %s28
      %s50 = sphi 0, %s52
      %s53 = sphi 0, %s50
      %s54 = sphi 0, %s53
      %s70 = sphi 0, %s54
      %s74 = sphi 0, %s74
      %s76 = sphi 0, %s74
      %s77 = sphi 0, %s76
      %s91 = sphi 0, %s77
      %s95 = sphi 0, %s95
      %s97 = sphi 0, %s95
      %s98 = sphi 0, %s97
      %s112 = sphi 0, %s98
      %s116 = sphi 0, %s116
      %s118 = sphi 0, %s116
      %s119 = sphi 0, %s118
      %s133 = sphi 0, %s119
      %s139 = sphi 0, %s141
      %s142 = sphi 0, %s139
      %s143 = sphi 0, %s142
      %s159 = sphi 0, %s143
      %s165 = sphi 0, %s167
      %s168 = sphi 0, %s165
      %s169 = sphi 0, %s168
      %s185 = sphi 0, %s169
    $region4: #{forward.1} parent=1 // loop_header_branch
      %17 = sbr.rel (%p15) target = $region8
    $region5: #{forward.1} parent=1 // loop_body
      %s19 = ssub.s32 %s14, 1
      %s20 = ssub.s32 %s14, 2
      %s21 = sadd.s32 %s14, 1
      %s22 = ssub.s32 %s14, %s21
      %p23 = scmp.eq.s32.totalorder %s22, 0
      %s25 = sadd.s32 %s24, 1
      %s26 = scalar_select %p23, %s24, %s25
      %p29 = pneg %p23
      %p30 = scmp.eq.s32.totalorder %s14, 1
      %p31 = por %p29, %p30
      %p32 = scmp.ne.s32.totalorder %s24, %s27
      %p33 = scmp.eq.s32.totalorder %s14, 0
      %p34 = por %p32, %p33
      %p35 = scmp.ne.s32.totalorder %s24, %s27
      %p36 = scmp.eq.s32.totalorder %s19, 1
      %p37 = por %p35, %p36
      %p38 = scmp.ne.s32.totalorder %s27, %s28
      %p39 = scmp.eq.s32.totalorder %s19, 0
      %p40 = por %p38, %p39
      %p41 = scmp.ne.s32.totalorder %s27, %s28
      %p42 = scmp.eq.s32.totalorder %s20, 1
      %p43 = por %p41, %p42
      %p45 = scmp.ne.s32.totalorder %s28, %s44
      %p46 = scmp.eq.s32.totalorder %s20, 0
      %p47 = por %p45, %p46
      %s48 = ssub.s32 %s14, %s21
      %p49 = scmp.eq.s32.totalorder %s48, 0
      %s51 = sadd.s32 %s50, 1
      %s52 = scalar_select %p49, %s50, %s51
      %p55 = pneg %p49
      %p56 = scmp.eq.s32.totalorder %s14, 1
      %p57 = por %p55, %p56
      %p58 = scmp.ne.s32.totalorder %s50, %s53
      %p59 = scmp.eq.s32.totalorder %s14, 0
      %p60 = por %p58, %p59
      %p61 = scmp.ne.s32.totalorder %s50, %s53
      %p62 = scmp.eq.s32.totalorder %s19, 1
      %p63 = por %p61, %p62
      %p64 = scmp.ne.s32.totalorder %s53, %s54
      %p65 = scmp.eq.s32.totalorder %s19, 0
      %p66 = por %p64, %p65
      %p67 = scmp.ne.s32.totalorder %s53, %s54
      %p68 = scmp.eq.s32.totalorder %s20, 1
      %p69 = por %p67, %p68
      %p71 = scmp.ne.s32.totalorder %s54, %s70
      %p72 = scmp.eq.s32.totalorder %s20, 0
      %p73 = por %p71, %p72
      %s75 = sadd.s32 %s74, 1
      %p78 = scmp.eq.s32.totalorder %s14, 1
      %p79 = scmp.ne.s32.totalorder %s74, %s76
      %p80 = scmp.eq.s32.totalorder %s14, 0
      %p81 = por %p79, %p80
      %p82 = scmp.ne.s32.totalorder %s74, %s76
      %p83 = scmp.eq.s32.totalorder %s19, 1
      %p84 = por %p82, %p83
      %p85 = scmp.ne.s32.totalorder %s76, %s77
      %p86 = scmp.eq.s32.totalorder %s19, 0
      %p87 = por %p85, %p86
      %p88 = scmp.ne.s32.totalorder %s76, %s77
      %p89 = scmp.eq.s32.totalorder %s20, 1
      %p90 = por %p88, %p89
      %p92 = scmp.ne.s32.totalorder %s77, %s91
      %p93 = scmp.eq.s32.totalorder %s20, 0
      %p94 = por %p92, %p93
      %s96 = sadd.s32 %s95, 1
      %p99 = scmp.eq.s32.totalorder %s14, 1
      %p100 = scmp.ne.s32.totalorder %s95, %s97
      %p101 = scmp.eq.s32.totalorder %s14, 0
      %p102 = por %p100, %p101
      %p103 = scmp.ne.s32.totalorder %s95, %s97
      %p104 = scmp.eq.s32.totalorder %s19, 1
      %p105 = por %p103, %p104
      %p106 = scmp.ne.s32.totalorder %s97, %s98
      %p107 = scmp.eq.s32.totalorder %s19, 0
      %p108 = por %p106, %p107
      %p109 = scmp.ne.s32.totalorder %s97, %s98
      %p110 = scmp.eq.s32.totalorder %s20, 1
      %p111 = por %p109, %p110
      %p113 = scmp.ne.s32.totalorder %s98, %s112
      %p114 = scmp.eq.s32.totalorder %s20, 0
      %p115 = por %p113, %p114
      %s117 = sadd.s32 %s116, 1
      %p120 = scmp.eq.s32.totalorder %s14, 1
      %p121 = scmp.ne.s32.totalorder %s116, %s118
      %p122 = scmp.eq.s32.totalorder %s14, 0
      %p123 = por %p121, %p122
      %p124 = scmp.ne.s32.totalorder %s116, %s118
      %p125 = scmp.eq.s32.totalorder %s19, 1
      %p126 = por %p124, %p125
      %p127 = scmp.ne.s32.totalorder %s118, %s119
      %p128 = scmp.eq.s32.totalorder %s19, 0
      %p129 = por %p127, %p128
      %p130 = scmp.ne.s32.totalorder %s118, %s119
      %p131 = scmp.eq.s32.totalorder %s20, 1
      %p132 = por %p130, %p131
      %p134 = scmp.ne.s32.totalorder %s119, %s133
      %p135 = scmp.eq.s32.totalorder %s20, 0
      %p136 = por %p134, %p135
      %s137 = ssub.s32 %s14, %s21
      %p138 = scmp.eq.s32.totalorder %s137, 0
      %s140 = sadd.s32 %s139, 1
      %s141 = scalar_select %p138, %s139, %s140
      %p144 = pneg %p138
      %p145 = scmp.eq.s32.totalorder %s14, 1
      %p146 = por %p144, %p145
      %p147 = scmp.ne.s32.totalorder %s139, %s142
      %p148 = scmp.eq.s32.totalorder %s14, 0
      %p149 = por %p147, %p148
      %p150 = scmp.ne.s32.totalorder %s139, %s142
      %p151 = scmp.eq.s32.totalorder %s19, 1
      %p152 = por %p150, %p151
      %p153 = scmp.ne.s32.totalorder %s142, %s143
      %p154 = scmp.eq.s32.totalorder %s19, 0
      %p155 = por %p153, %p154
      %p156 = scmp.ne.s32.totalorder %s142, %s143
      %p157 = scmp.eq.s32.totalorder %s20, 1
      %p158 = por %p156, %p157
      %p160 = scmp.ne.s32.totalorder %s143, %s159
      %p161 = scmp.eq.s32.totalorder %s20, 0
      %p162 = por %p160, %p161
      %s163 = ssub.s32 %s14, %s21
      %p164 = scmp.eq.s32.totalorder %s163, 0
      %s166 = sadd.s32 %s165, 1
      %s167 = scalar_select %p164, %s165, %s166
      %p170 = pneg %p164
      %p171 = scmp.eq.s32.totalorder %s14, 1
      %p172 = por %p170, %p171
      %p173 = scmp.ne.s32.totalorder %s165, %s168
      %p174 = scmp.eq.s32.totalorder %s14, 0
      %p175 = por %p173, %p174
      %p176 = scmp.ne.s32.totalorder %s165, %s168
      %p177 = scmp.eq.s32.totalorder %s19, 1
      %p178 = por %p176, %p177
      %p179 = scmp.ne.s32.totalorder %s168, %s169
      %p180 = scmp.eq.s32.totalorder %s19, 0
      %p181 = por %p179, %p180
      %p182 = scmp.ne.s32.totalorder %s168, %s169
      %p183 = scmp.eq.s32.totalorder %s20, 1
      %p184 = por %p182, %p183
      %p186 = scmp.ne.s32.totalorder %s169, %s185
      %p187 = scmp.eq.s32.totalorder %s20, 0
      %p188 = por %p186, %p187
      %p189 = scmp.le.s32.totalorder 1, %s14
      %p190 = scmp.lt.s32.totalorder %s14, 3
      %p191 = pnand %p189, %p190
      %p192 = pneg %p191
      // Predicated region
      $region9: #{forward.1} parent=5 // pred_check
        _
      $region10: #{forward.1} parent=5 // pred_check_branch
        %194 = sbr.rel (%p191) target = $region12
      $region11: #{forward.1} parent=5 // pred_region
        %s195 = ssub.s32 %s14, 1
        // Predicated region
        $region13: #{forward.1} parent=11 // pred_check
          %p196 = pneg %p87
        $region14: #{forward.1} parent=11 // pred_check_branch
          %198 = sbr.rel (%p196) target = $region16
        $region15: #{forward.1} parent=11 // pred_region
          _
        $region16: #{forward.1} parent=11 // pred_fallthru
          _
        // Predicated region
        $region17: #{forward.1} parent=11 // pred_check
          %p199 = pneg %p108
        $region18: #{forward.1} parent=11 // pred_check_branch
          %201 = sbr.rel (%p199) target = $region20
        $region19: #{forward.1} parent=11 // pred_region
          _
        $region20: #{forward.1} parent=11 // pred_fallthru
          _
        // Predicated region
        $region21: #{forward.1} parent=11 // pred_check
          %p202 = pneg %p129
        $region22: #{forward.1} parent=11 // pred_check_branch
          %204 = sbr.rel (%p202) target = $region24
        $region23: #{forward.1} parent=11 // pred_region
          %s206 = ssub.s32 16, 16
          %207 = vsyncadd [#allocation3], %s206
          %s209 = sshll.u32 %s4, 4
          %s210 = int_to_ptr.vmem [resolvable:$true] %s209
          %212 = dma.vmem_to_smem %s210, 16, [#allocation2], [#allocation3]
        $region24: #{forward.1} parent=11 // pred_fallthru
          _
      $region12: #{forward.1} parent=5 // pred_fallthru
        _
      %p213 = scmp.lt.s32.totalorder %s14, 2
      // Predicated region
      $region25: #{forward.1} parent=5 // pred_check
        %p214 = pneg %p213
      $region26: #{forward.1} parent=5 // pred_check_branch
        %216 = sbr.rel (%p214) target = $region28
      $region27: #{forward.1} parent=5 // pred_region
        // Predicated region
        $region29: #{forward.1} parent=27 // pred_check
          %p217 = pneg %p34
        $region30: #{forward.1} parent=27 // pred_check_branch
          %219 = sbr.rel (%p217) target = $region32
        $region31: #{forward.1} parent=27 // pred_region
          %p220 = scmp.lt.s32.totalorder %s14, 1
          %s221 = scalar_select %p220, %s14, 1
          %s222 = smul.addr %s221, 2
          %s223 = smul.addr %s222, 2
          %s224 = scalar_lea.vmem %s0, %s223
        $region32: #{forward.1} parent=27 // pred_fallthru
          _
        // Predicated region
        $region33: #{forward.1} parent=27 // pred_check
          %p225 = pneg %p60
        $region34: #{forward.1} parent=27 // pred_check_branch
          %227 = sbr.rel (%p225) target = $region36
        $region35: #{forward.1} parent=27 // pred_region
          %p228 = scmp.lt.s32.totalorder %s14, 1
          %s229 = scalar_select %p228, %s14, 1
          %s230 = smul.addr %s229, 2
          %s231 = smul.addr %s230, 2
          %s232 = scalar_lea.vmem %s1, %s231
        $region36: #{forward.1} parent=27 // pred_fallthru
          _
      $region28: #{forward.1} parent=5 // pred_fallthru
        _
      %p233 = scmp.le.s32.totalorder 1, %s14
      %p234 = scmp.lt.s32.totalorder %s14, 3
      %p235 = pnand %p233, %p234
      %p236 = pneg %p235
      // Predicated region
      $region37: #{forward.1} parent=5 // pred_check
        _
      $region38: #{forward.1} parent=5 // pred_check_branch
        %238 = sbr.rel (%p235) target = $region40
      $region39: #{forward.1} parent=5 // pred_region
        %s239 = ssub.s32 %s14, 1
        // Predicated region
        $region41: #{forward.1} parent=39 // pred_check
          %p240 = pneg %p129
        $region42: #{forward.1} parent=39 // pred_check_branch
          %242 = sbr.rel (%p240) target = $region44
        $region43: #{forward.1} parent=39 // pred_region
          %243 = dma.done [#allocation3], 16
        $region44: #{forward.1} parent=39 // pred_fallthru
          _
        %244 = sfence
        %p245 = scmp.lt.s32.totalorder %s19, 1
        %s246 = scalar_select %p245, %s19, 1
        %s247 = smul.addr %s246, 2
        %s248 = smul.addr %s247, 2
        %s249 = scalar_lea.vmem %s0, %s248
        %p250 = pneg %p40
        %p251 = pneg %p37
        %p252 = scmp.lt.s32.totalorder %s19, 1
        %s253 = scalar_select %p252, %s19, 1
        %s254 = smul.addr %s253, 2
        %s255 = smul.addr %s254, 2
        %s256 = scalar_lea.vmem %s1, %s255
        %p257 = pneg %p66
        %p258 = pneg %p63
        %p259 = pneg %p87
        %p260 = pneg %p84
        %p261 = pneg %p108
        %p262 = pneg %p105
        %p263 = pneg %p129
        %p264 = pneg %p126
        %p265 = pneg %p155
        %p266 = pneg %p152
        %p267 = scmp.lt.s32.totalorder %s19, 1
        %s268 = scalar_select %p267, %s19, 1
        %s269 = smul.addr %s268, 2
        %s270 = smul.addr %s269, 4
        %s271 = scalar_lea.vmem %s5, %s270
        %p272 = pneg %p181
        %p273 = pneg %p178
        %p274 = scmp.lt.s32.totalorder %s19, 1
        %s275 = scalar_select %p274, %s19, 1
        %s276 = smul.addr %s275, 4
        %s277 = scalar_lea.vmem %s6, %s276
        %p278 = scmp.lt.s32.totalorder %s19, 1
        %s279 = scalar_select %p278, %s19, 1
        %s280 = smul.addr %s279, 2
        %s281 = smul.addr %s280, 2
        %s282 = scalar_lea.vmem %s0, %s281
        %p283 = scmp.lt.s32.totalorder %s19, 1
        %s284 = scalar_select %p283, %s19, 1
        %s285 = smul.addr %s284, 2
        %s286 = smul.addr %s285, 2
        %s287 = scalar_lea.vmem %s1, %s286
        %p288 = scmp.lt.s32.totalorder %s19, 1
        %s289 = scalar_select %p288, %s19, 1
        %s290 = smul.addr %s289, 2
        %s291 = smul.addr %s290, 4
        %s292 = scalar_lea.vmem %s5, %s291
        %p293 = scmp.lt.s32.totalorder %s19, 1
        %s294 = scalar_select %p293, %s19, 1
        %s295 = smul.addr %s294, 4
        %s296 = scalar_lea.vmem %s6, %s295
        %v297 = vld [vmem:[%s2] sm:$0x3]
        %v298 = vld [vmem:[%s3] sm:$0x3]
        %v299 = vld [vmem:[%s282] sm:$0xf]
        %v300 = vunpack.c.l.bf16 %v299
        %v301 = vld [vmem:[%s287] sm:$0xf]
        %v302 = vunpack.c.l.bf16 %v301
        %s303 = sld [smem:[#allocation2 + $0x10]]
        %v304 = vstv %s303
        %v305 = vmul.f32 %v304, %v300
        %s306 = sld [smem:[#allocation2 + $0x1c]]
        %v307 = vstv %s306
        %v308 = vadd.f32 %v305, %v307
        %s309 = sld [smem:[#allocation2 + $0x11]]
        %v310 = vstv %s309
        %v311 = vmul.f32 %v310, %v300
        %v313 = vrot.slane %v311, 5
        %v314 = vrot.slane %v313, 4
        %v316 = vadd.f32 %v308, %v314
        %s317 = sld [smem:[#allocation2 + $0x12]]
        %v318 = vstv %s317
        %v319 = vmul.f32 %v318, %v300
        %v321 = vrot.slane %v319, 6
        %v322 = vrot.slane %v321, 4
        %v324 = vadd.f32 %v316, %v322
        %s325 = sld [smem:[#allocation2 + $0x13]]
        %v326 = vstv %s325
        %v327 = vmul.f32 %v326, %v300
        %s328 = sld [smem:[#allocation2 + $0x1d]]
        %v329 = vstv %s328
        %v330 = vadd.f32 %v327, %v329
        %s331 = sld [smem:[#allocation2 + $0x14]]
        %v332 = vstv %s331
        %v333 = vmul.f32 %v332, %v300
        %v335 = vrot.slane %v333, 5
        %v336 = vrot.slane %v335, 4
        %v338 = vadd.f32 %v330, %v336
        %s339 = sld [smem:[#allocation2 + $0x15]]
        %v340 = vstv %s339
        %v341 = vmul.f32 %v340, %v300
        %v343 = vrot.slane %v341, 6
        %v344 = vrot.slane %v343, 4
        %v346 = vadd.f32 %v338, %v344
        %s347 = sld [smem:[#allocation2 + $0x16]]
        %v348 = vstv %s347
        %v349 = vmul.f32 %v348, %v300
        %s350 = sld [smem:[#allocation2 + $0x1e]]
        %v351 = vstv %s350
        %v352 = vadd.f32 %v349, %v351
        %s353 = sld [smem:[#allocation2 + $0x17]]
        %v354 = vstv %s353
        %v355 = vmul.f32 %v354, %v300
        %v357 = vrot.slane %v355, 5
        %v358 = vrot.slane %v357, 4
        %v360 = vadd.f32 %v352, %v358
        %s361 = sld [smem:[#allocation2 + $0x18]]
        %v362 = vstv %s361
        %v363 = vmul.f32 %v362, %v300
        %v365 = vrot.slane %v363, 6
        %v366 = vrot.slane %v365, 4
        %v368 = vadd.f32 %v360, %v366
        %s369 = sld [smem:[#allocation2 + $0x19]]
        %v370 = vstv %s369
        %v371 = vmul.f32 %v370, %v300
        %s372 = sld [smem:[#allocation2 + $0x1f]]
        %v373 = vstv %s372
        %v374 = vadd.f32 %v371, %v373
        %s375 = sld [smem:[#allocation2 + $0x1a]]
        %v376 = vstv %s375
        %v377 = vmul.f32 %v376, %v300
        %v379 = vrot.slane %v377, 5
        %v380 = vrot.slane %v379, 4
        %v382 = vadd.f32 %v374, %v380
        %s383 = sld [smem:[#allocation2 + $0x1b]]
        %v384 = vstv %s383
        %v385 = vmul.f32 %v384, %v300
        %v387 = vrot.slane %v385, 6
        %v388 = vrot.slane %v387, 4
        %v390 = vadd.f32 %v382, %v388
        %v391 = vmul.f32 %v304, %v302
        %v392 = vadd.f32 %v391, %v307
        %v393 = vmul.f32 %v310, %v302
        %v395 = vrot.slane %v393, 5
        %v396 = vrot.slane %v395, 4
        %v398 = vadd.f32 %v392, %v396
        %v399 = vmul.f32 %v318, %v302
        %v401 = vrot.slane %v399, 6
        %v402 = vrot.slane %v401, 4
        %v404 = vadd.f32 %v398, %v402
        %v405 = vmul.f32 %v326, %v302
        %v406 = vadd.f32 %v405, %v329
        %v407 = vmul.f32 %v332, %v302
        %v409 = vrot.slane %v407, 5
        %v410 = vrot.slane %v409, 4
        %v412 = vadd.f32 %v406, %v410
        %v413 = vmul.f32 %v340, %v302
        %v415 = vrot.slane %v413, 6
        %v416 = vrot.slane %v415, 4
        %v418 = vadd.f32 %v412, %v416
        %v419 = vmul.f32 %v348, %v302
        %v420 = vadd.f32 %v419, %v351
        %v421 = vmul.f32 %v354, %v302
        %v423 = vrot.slane %v421, 5
        %v424 = vrot.slane %v423, 4
        %v426 = vadd.f32 %v420, %v424
        %v427 = vmul.f32 %v362, %v302
        %v429 = vrot.slane %v427, 6
        %v430 = vrot.slane %v429, 4
        %v432 = vadd.f32 %v426, %v430
        %v433 = vmul.f32 %v370, %v302
        %v434 = vadd.f32 %v433, %v373
        %v435 = vmul.f32 %v376, %v302
        %v437 = vrot.slane %v435, 5
        %v438 = vrot.slane %v437, 4
        %v440 = vadd.f32 %v434, %v438
        %v441 = vmul.f32 %v384, %v302
        %v443 = vrot.slane %v441, 6
        %v444 = vrot.slane %v443, 4
        %v446 = vadd.f32 %v440, %v444
        %v448 = vlaneseq
        %v449 = vshrl.u32 %v448, 7
        %v450 = vsub.s32 0, %v449
        %v451 = vrot.slane %v324, %v450
        %v452 = vlaneseq
        %v453 = vshrl.u32 %v452, 7
        %v454 = vsub.s32 4, %v453
        %v455 = vrot.slane %v324, %v454
        %v459 = vlaneseq
        %v460 = vshrl.u32 %v459, 7
        %v461 = vsub.s32 0, %v460
        %v462 = vrot.slane %v346, %v461
        %v463 = vlaneseq
        %v464 = vshrl.u32 %v463, 7
        %v465 = vsub.s32 4, %v464
        %v466 = vrot.slane %v346, %v465
        %v470 = vlaneseq
        %v471 = vshrl.u32 %v470, 7
        %v472 = vsub.s32 0, %v471
        %v473 = vrot.slane %v368, %v472
        %v474 = vlaneseq
        %v475 = vshrl.u32 %v474, 7
        %v476 = vsub.s32 4, %v475
        %v477 = vrot.slane %v368, %v476
        %v481 = vlaneseq
        %v482 = vshrl.u32 %v481, 7
        %v483 = vsub.s32 0, %v482
        %v484 = vrot.slane %v390, %v483
        %v485 = vlaneseq
        %v486 = vshrl.u32 %v485, 7
        %v487 = vsub.s32 4, %v486
        %v488 = vrot.slane %v390, %v487
        %v492 = vlaneseq
        %v493 = vshrl.u32 %v492, 7
        %v494 = vsub.s32 0, %v493
        %v495 = vrot.slane %v404, %v494
        %v496 = vlaneseq
        %v497 = vshrl.u32 %v496, 7
        %v498 = vsub.s32 4, %v497
        %v499 = vrot.slane %v404, %v498
        %v503 = vlaneseq
        %v504 = vshrl.u32 %v503, 7
        %v505 = vsub.s32 0, %v504
        %v506 = vrot.slane %v418, %v505
        %v507 = vlaneseq
        %v508 = vshrl.u32 %v507, 7
        %v509 = vsub.s32 4, %v508
        %v510 = vrot.slane %v418, %v509
        %v514 = vlaneseq
        %v515 = vshrl.u32 %v514, 7
        %v516 = vsub.s32 0, %v515
        %v517 = vrot.slane %v432, %v516
        %v518 = vlaneseq
        %v519 = vshrl.u32 %v518, 7
        %v520 = vsub.s32 4, %v519
        %v521 = vrot.slane %v432, %v520
        %v525 = vlaneseq
        %v526 = vshrl.u32 %v525, 7
        %v527 = vsub.s32 0, %v526
        %v528 = vrot.slane %v446, %v527
        %v529 = vlaneseq
        %v530 = vshrl.u32 %v529, 7
        %v531 = vsub.s32 4, %v530
        %v532 = vrot.slane %v446, %v531
        %vm535 = vcmask 1040384
        %v536 = vsel %vm535, %v451, %v462
        %v537 = vsel %vm535, %v455, %v466
        %vm538 = vcmask 1041408
        %v539 = vsel %vm538, %v536, %v473
        %v540 = vsel %vm538, %v537, %v477
        %vm541 = vcmask 1042432
        %v542 = vsel %vm541, %v539, %v484
        %v543 = vsel %vm541, %v540, %v488
        %vm544 = vcmask 1043456
        %v545 = vsel %vm544, %v542, %v495
        %v546 = vsel %vm544, %v543, %v499
        %vm547 = vcmask 1044480
        %v548 = vsel %vm547, %v545, %v506
        %v549 = vsel %vm547, %v546, %v510
        %vm550 = vcmask 1045504
        %v551 = vsel %vm550, %v548, %v517
        %v552 = vsel %vm550, %v549, %v521
        %vm553 = vcmask 1046528
        %v554 = vsel %vm553, %v551, %v528
        %v555 = vsel %vm553, %v552, %v532
        %s556 = sld [smem:[#allocation2]]
        %v557 = vstv %s556
        %v558 = vmul.f32 %v557, %v300
        %s559 = sld [smem:[#allocation2 + $0xc]]
        %v560 = vstv %s559
        %v561 = vadd.f32 %v558, %v560
        %s562 = sld [smem:[#allocation2 + $0x1]]
        %v563 = vstv %s562
        %v564 = vmul.f32 %v563, %v300
        %v566 = vrot.slane %v564, 5
        %v567 = vrot.slane %v566, 4
        %v569 = vadd.f32 %v561, %v567
        %s570 = sld [smem:[#allocation2 + $0x2]]
        %v571 = vstv %s570
        %v572 = vmul.f32 %v571, %v300
        %v574 = vrot.slane %v572, 6
        %v575 = vrot.slane %v574, 4
        %v577 = vadd.f32 %v569, %v575
        %s578 = sld [smem:[#allocation2 + $0x3]]
        %v579 = vstv %s578
        %v580 = vmul.f32 %v579, %v300
        %s581 = sld [smem:[#allocation2 + $0xd]]
        %v582 = vstv %s581
        %v583 = vadd.f32 %v580, %v582
        %s584 = sld [smem:[#allocation2 + $0x4]]
        %v585 = vstv %s584
        %v586 = vmul.f32 %v585, %v300
        %v588 = vrot.slane %v586, 5
        %v589 = vrot.slane %v588, 4
        %v591 = vadd.f32 %v583, %v589
        %s592 = sld [smem:[#allocation2 + $0x5]]
        %v593 = vstv %s592
        %v594 = vmul.f32 %v593, %v300
        %v596 = vrot.slane %v594, 6
        %v597 = vrot.slane %v596, 4
        %v599 = vadd.f32 %v591, %v597
        %s600 = sld [smem:[#allocation2 + $0x6]]
        %v601 = vstv %s600
        %v602 = vmul.f32 %v601, %v300
        %s603 = sld [smem:[#allocation2 + $0xe]]
        %v604 = vstv %s603
        %v605 = vadd.f32 %v602, %v604
        %s606 = sld [smem:[#allocation2 + $0x7]]
        %v607 = vstv %s606
        %v608 = vmul.f32 %v607, %v300
        %v610 = vrot.slane %v608, 5
        %v611 = vrot.slane %v610, 4
        %v613 = vadd.f32 %v605, %v611
        %s614 = sld [smem:[#allocation2 + $0x8]]
        %v615 = vstv %s614
        %v616 = vmul.f32 %v615, %v300
        %v618 = vrot.slane %v616, 6
        %v619 = vrot.slane %v618, 4
        %v621 = vadd.f32 %v613, %v619
        %s622 = sld [smem:[#allocation2 + $0x9]]
        %v623 = vstv %s622
        %v624 = vmul.f32 %v623, %v300
        %s625 = sld [smem:[#allocation2 + $0xf]]
        %v626 = vstv %s625
        %v627 = vadd.f32 %v624, %v626
        %s628 = sld [smem:[#allocation2 + $0xa]]
        %v629 = vstv %s628
        %v630 = vmul.f32 %v629, %v300
        %v632 = vrot.slane %v630, 5
        %v633 = vrot.slane %v632, 4
        %v635 = vadd.f32 %v627, %v633
        %s636 = sld [smem:[#allocation2 + $0xb]]
        %v637 = vstv %s636
        %v638 = vmul.f32 %v637, %v300
        %v640 = vrot.slane %v638, 6
        %v641 = vrot.slane %v640, 4
        %v643 = vadd.f32 %v635, %v641
        %v644 = vmul.f32 %v557, %v302
        %v645 = vadd.f32 %v644, %v560
        %v646 = vmul.f32 %v563, %v302
        %v648 = vrot.slane %v646, 5
        %v649 = vrot.slane %v648, 4
        %v651 = vadd.f32 %v645, %v649
        %v652 = vmul.f32 %v571, %v302
        %v654 = vrot.slane %v652, 6
        %v655 = vrot.slane %v654, 4
        %v657 = vadd.f32 %v651, %v655
        %v658 = vmul.f32 %v579, %v302
        %v659 = vadd.f32 %v658, %v582
        %v660 = vmul.f32 %v585, %v302
        %v662 = vrot.slane %v660, 5
        %v663 = vrot.slane %v662, 4
        %v665 = vadd.f32 %v659, %v663
        %v666 = vmul.f32 %v593, %v302
        %v668 = vrot.slane %v666, 6
        %v669 = vrot.slane %v668, 4
        %v671 = vadd.f32 %v665, %v669
        %v672 = vmul.f32 %v601, %v302
        %v673 = vadd.f32 %v672, %v604
        %v674 = vmul.f32 %v607, %v302
        %v676 = vrot.slane %v674, 5
        %v677 = vrot.slane %v676, 4
        %v679 = vadd.f32 %v673, %v677
        %v680 = vmul.f32 %v615, %v302
        %v682 = vrot.slane %v680, 6
        %v683 = vrot.slane %v682, 4
        %v685 = vadd.f32 %v679, %v683
        %v686 = vmul.f32 %v623, %v302
        %v687 = vadd.f32 %v686, %v626
        %v688 = vmul.f32 %v629, %v302
        %v690 = vrot.slane %v688, 5
        %v691 = vrot.slane %v690, 4
        %v693 = vadd.f32 %v687, %v691
        %v694 = vmul.f32 %v637, %v302
        %v696 = vrot.slane %v694, 6
        %v697 = vrot.slane %v696, 4
        %v699 = vadd.f32 %v693, %v697
        %v701 = vlaneseq
        %v702 = vshrl.u32 %v701, 7
        %v703 = vsub.s32 0, %v702
        %v704 = vrot.slane %v577, %v703
        %v705 = vlaneseq
        %v706 = vshrl.u32 %v705, 7
        %v707 = vsub.s32 4, %v706
        %v708 = vrot.slane %v577, %v707
        %v712 = vlaneseq
        %v713 = vshrl.u32 %v712, 7
        %v714 = vsub.s32 0, %v713
        %v715 = vrot.slane %v599, %v714
        %v716 = vlaneseq
        %v717 = vshrl.u32 %v716, 7
        %v718 = vsub.s32 4, %v717
        %v719 = vrot.slane %v599, %v718
        %v723 = vlaneseq
        %v724 = vshrl.u32 %v723, 7
        %v725 = vsub.s32 0, %v724
        %v726 = vrot.slane %v621, %v725
        %v727 = vlaneseq
        %v728 = vshrl.u32 %v727, 7
        %v729 = vsub.s32 4, %v728
        %v730 = vrot.slane %v621, %v729
        %v734 = vlaneseq
        %v735 = vshrl.u32 %v734, 7
        %v736 = vsub.s32 0, %v735
        %v737 = vrot.slane %v643, %v736
        %v738 = vlaneseq
        %v739 = vshrl.u32 %v738, 7
        %v740 = vsub.s32 4, %v739
        %v741 = vrot.slane %v643, %v740
        %v745 = vlaneseq
        %v746 = vshrl.u32 %v745, 7
        %v747 = vsub.s32 0, %v746
        %v748 = vrot.slane %v657, %v747
        %v749 = vlaneseq
        %v750 = vshrl.u32 %v749, 7
        %v751 = vsub.s32 4, %v750
        %v752 = vrot.slane %v657, %v751
        %v756 = vlaneseq
        %v757 = vshrl.u32 %v756, 7
        %v758 = vsub.s32 0, %v757
        %v759 = vrot.slane %v671, %v758
        %v760 = vlaneseq
        %v761 = vshrl.u32 %v760, 7
        %v762 = vsub.s32 4, %v761
        %v763 = vrot.slane %v671, %v762
        %v767 = vlaneseq
        %v768 = vshrl.u32 %v767, 7
        %v769 = vsub.s32 0, %v768
        %v770 = vrot.slane %v685, %v769
        %v771 = vlaneseq
        %v772 = vshrl.u32 %v771, 7
        %v773 = vsub.s32 4, %v772
        %v774 = vrot.slane %v685, %v773
        %v778 = vlaneseq
        %v779 = vshrl.u32 %v778, 7
        %v780 = vsub.s32 0, %v779
        %v781 = vrot.slane %v699, %v780
        %v782 = vlaneseq
        %v783 = vshrl.u32 %v782, 7
        %v784 = vsub.s32 4, %v783
        %v785 = vrot.slane %v699, %v784
        %v788 = vsel %vm535, %v704, %v715
        %v789 = vsel %vm535, %v708, %v719
        %v790 = vsel %vm538, %v788, %v726
        %v791 = vsel %vm538, %v789, %v730
        %v792 = vsel %vm541, %v790, %v737
        %v793 = vsel %vm541, %v791, %v741
        %v794 = vsel %vm544, %v792, %v748
        %v795 = vsel %vm544, %v793, %v752
        %v796 = vsel %vm547, %v794, %v759
        %v797 = vsel %vm547, %v795, %v763
        %v798 = vsel %vm550, %v796, %v770
        %v799 = vsel %vm550, %v797, %v774
        %v800 = vsel %vm553, %v798, %v781
        %v801 = vsel %vm553, %v799, %v785
        %v802 = vmax.f32 %v554, %v555
        %803 = vmax.xlane.f32.xlu0 %v802
        %v804 = vpop.xlane.xlu0 %803
        %v805 = vsub.f32 %v554, %v804
        %v806 = vsub.f32 %v555, %v804
        %v807 = vmul.f32 %v805, 1.442695
        %v808 = vpow.pop %v807
        %v809 = vmul.f32 %v806, 1.442695
        %v810 = vpow.pop %v809
        %v811 = vadd.f32 %v808, %v810
        %812 = vadd.xlane.f32.xlu0 %v811
        %v813 = vpop.xlane.xlu0 %812
        %v814 = vrcp.pop %v813
        %v815 = vmul.f32 1.0, %v814
        %v817 = vlaneseq
        %v818 = vshrl.u32 %v817, 7
        %v819 = vsub.s32 0, %v818
        %v820 = vrot.slane %v297, %v819
        %v821 = vlaneseq
        %v822 = vshrl.u32 %v821, 7
        %v823 = vsub.s32 1, %v822
        %v824 = vrot.slane %v297, %v823
        %v827 = vmul.f32 %v808, %v820
        %v828 = vmul.f32 %v810, %v824
        %v829 = vadd.f32 %v827, %v828
        %830 = vadd.xlane.f32.xlu0 %v829
        %v831 = vpop.xlane.xlu0 %830
        %v832 = vmul.f32 %v831, %v815
        %v834 = vlaneseq
        %v835 = vshrl.u32 %v834, 7
        %v836 = vsub.s32 0, %v835
        %v837 = vrot.slane %v298, %v836
        %v838 = vlaneseq
        %v839 = vshrl.u32 %v838, 7
        %v840 = vsub.s32 1, %v839
        %v841 = vrot.slane %v298, %v840
        %v844 = vmul.f32 %v808, %v837
        %v845 = vmul.f32 %v810, %v841
        %v846 = vadd.f32 %v844, %v845
        %847 = vadd.xlane.f32.xlu0 %v846
        %v848 = vpop.xlane.xlu0 %847
        %v849 = vmul.f32 %v848, %v815
        %v850 = vsub.f32 %v820, %v832
        %v851 = vsub.f32 %v824, %v832
        %v852 = vmul.f32 %v850, %v850
        %v853 = vmul.f32 %v851, %v851
        %v854 = vsub.f32 %v837, %v849
        %v855 = vsub.f32 %v841, %v849
        %v856 = vmul.f32 %v854, %v854
        %v857 = vmul.f32 %v855, %v855
        %v858 = vadd.f32 %v852, %v856
        %v859 = vadd.f32 %v853, %v857
        %v860 = vmul.f32 %v858, 100.0
        %v861 = vmul.f32 %v859, 100.0
        %v862 = vsub.f32 0.0, %v860
        %v863 = vsub.f32 0.0, %v861
        %v864 = vmul.f32 %v862, 1.442695
        %v865 = vpow.pop %v864
        %v866 = vmul.f32 %v863, 1.442695
        %v867 = vpow.pop %v866
        %v868 = vsub.f32 1.0, %v865
        %v869 = vsub.f32 1.0, %v867
        %v872 = vrot.slane %v868, 4
        %v873 = vrot.slane %v869, 4
        %v876 = vmul.f32 %v868, %v872
        %v877 = vmul.f32 %v869, %v873
        %v878 = vlaneseq
        %v879 = vshrl.u32 %v878, 7
        %v880 = vsub.s32 4, %v879
        %v881 = vrot.slane %v865, %v880
        %v882 = vlaneseq
        %v883 = vshrl.u32 %v882, 7
        %v884 = vsub.s32 4, %v883
        %v885 = vrot.slane %v867, %v884
        %v886 = vmul.f32 %v881, %v800
        %v887 = vmul.f32 %v885, %v801
        %v888 = vlaneseq
        %v889 = vshrl.u32 %v888, 7
        %v890 = vsub.s32 5, %v889
        %v891 = vrot.slane %v865, %v890
        %v892 = vlaneseq
        %v893 = vshrl.u32 %v892, 7
        %v894 = vsub.s32 5, %v893
        %v895 = vrot.slane %v867, %v894
        %v896 = vmul.f32 %v891, %v800
        %v897 = vmul.f32 %v895, %v801
        %v898 = vlaneseq
        %v899 = vshrl.u32 %v898, 7
        %v900 = vsub.s32 6, %v899
        %v901 = vrot.slane %v865, %v900
        %v902 = vlaneseq
        %v903 = vshrl.u32 %v902, 7
        %v904 = vsub.s32 6, %v903
        %v905 = vrot.slane %v867, %v904
        %v906 = vmul.f32 %v901, %v800
        %v907 = vmul.f32 %v905, %v801
        %v908 = vlaneseq
        %v909 = vshrl.u32 %v908, 7
        %v910 = vsub.s32 7, %v909
        %v911 = vrot.slane %v865, %v910
        %v912 = vlaneseq
        %v913 = vshrl.u32 %v912, 7
        %v914 = vsub.s32 7, %v913
        %v915 = vrot.slane %v867, %v914
        %v916 = vmul.f32 %v911, %v800
        %v917 = vmul.f32 %v915, %v801
        %v918 = vlaneseq
        %v919 = vshrl.u32 %v918, 7
        %v920 = vsub.s32 0, %v919
        %v921 = vrot.slane %v876, %v920
        %v922 = vlaneseq
        %v923 = vshrl.u32 %v922, 7
        %v924 = vsub.s32 0, %v923
        %v925 = vrot.slane %v877, %v924
        %v926 = vmul.f32 %v921, %v800
        %v927 = vmul.f32 %v925, %v801
        %v930 = vrot.slane %v886, 4
        %v931 = vrot.slane %v887, 4
        %v934 = vadd.f32 %v926, %v930
        %v935 = vadd.f32 %v927, %v931
        %v936 = vlaneseq
        %v937 = vshrl.u32 %v936, 7
        %v938 = vsub.s32 1, %v937
        %v939 = vrot.slane %v876, %v938
        %v940 = vlaneseq
        %v941 = vshrl.u32 %v940, 7
        %v942 = vsub.s32 1, %v941
        %v943 = vrot.slane %v877, %v942
        %v944 = vmul.f32 %v939, %v934
        %v945 = vmul.f32 %v943, %v935
        %v948 = vrot.slane %v896, 4
        %v949 = vrot.slane %v897, 4
        %v952 = vadd.f32 %v944, %v948
        %v953 = vadd.f32 %v945, %v949
        %v954 = vlaneseq
        %v955 = vshrl.u32 %v954, 7
        %v956 = vsub.s32 2, %v955
        %v957 = vrot.slane %v876, %v956
        %v958 = vlaneseq
        %v959 = vshrl.u32 %v958, 7
        %v960 = vsub.s32 2, %v959
        %v961 = vrot.slane %v877, %v960
        %v962 = vmul.f32 %v957, %v952
        %v963 = vmul.f32 %v961, %v953
        %v966 = vrot.slane %v906, 4
        %v967 = vrot.slane %v907, 4
        %v970 = vadd.f32 %v962, %v966
        %v971 = vadd.f32 %v963, %v967
        %v972 = vlaneseq
        %v973 = vshrl.u32 %v972, 7
        %v974 = vsub.s32 3, %v973
        %v975 = vrot.slane %v876, %v974
        %v976 = vlaneseq
        %v977 = vshrl.u32 %v976, 7
        %v978 = vsub.s32 3, %v977
        %v979 = vrot.slane %v877, %v978
        %v980 = vmul.f32 %v975, %v970
        %v981 = vmul.f32 %v979, %v971
        %v984 = vrot.slane %v916, 4
        %v985 = vrot.slane %v917, 4
        %v988 = vadd.f32 %v980, %v984
        %v989 = vadd.f32 %v981, %v985
        %s990 = sld [smem:[#allocation2 + $0x20]]
        %v991 = vstv %s990
        %v992 = vmul.f32 %v991, %v988
        %v993 = vmul.f32 %v991, %v989
        %s994 = sld [smem:[#allocation2 + $0x2c]]
        %v995 = vstv %s994
        %v996 = vadd.f32 %v992, %v995
        %v997 = vadd.f32 %v993, %v995
        %s998 = sld [smem:[#allocation2 + $0x21]]
        %v999 = vstv %s998
        %v1000 = vmul.f32 %v999, %v988
        %v1001 = vmul.f32 %v999, %v989
        %v1004 = vrot.slane %v1000, 1
        %v1005 = vrot.slane %v1001, 1
        %v1008 = vadd.f32 %v996, %v1004
        %v1009 = vadd.f32 %v997, %v1005
        %s1010 = sld [smem:[#allocation2 + $0x22]]
        %v1011 = vstv %s1010
        %v1012 = vmul.f32 %v1011, %v988
        %v1013 = vmul.f32 %v1011, %v989
        %v1016 = vrot.slane %v1012, 2
        %v1017 = vrot.slane %v1013, 2
        %v1020 = vadd.f32 %v1008, %v1016
        %v1021 = vadd.f32 %v1009, %v1017
        %s1022 = sld [smem:[#allocation2 + $0x23]]
        %v1023 = vstv %s1022
        %v1024 = vmul.f32 %v1023, %v988
        %v1025 = vmul.f32 %v1023, %v989
        %v1028 = vrot.slane %v1024, 3
        %v1029 = vrot.slane %v1025, 3
        %v1032 = vadd.f32 %v1020, %v1028
        %v1033 = vadd.f32 %v1021, %v1029
        %s1034 = sld [smem:[#allocation2 + $0x24]]
        %v1035 = vstv %s1034
        %v1036 = vmul.f32 %v1035, %v988
        %v1037 = vmul.f32 %v1035, %v989
        %s1038 = sld [smem:[#allocation2 + $0x2d]]
        %v1039 = vstv %s1038
        %v1040 = vadd.f32 %v1036, %v1039
        %v1041 = vadd.f32 %v1037, %v1039
        %s1042 = sld [smem:[#allocation2 + $0x25]]
        %v1043 = vstv %s1042
        %v1044 = vmul.f32 %v1043, %v988
        %v1045 = vmul.f32 %v1043, %v989
        %v1048 = vrot.slane %v1044, 1
        %v1049 = vrot.slane %v1045, 1
        %v1052 = vadd.f32 %v1040, %v1048
        %v1053 = vadd.f32 %v1041, %v1049
        %s1054 = sld [smem:[#allocation2 + $0x26]]
        %v1055 = vstv %s1054
        %v1056 = vmul.f32 %v1055, %v988
        %v1057 = vmul.f32 %v1055, %v989
        %v1060 = vrot.slane %v1056, 2
        %v1061 = vrot.slane %v1057, 2
        %v1064 = vadd.f32 %v1052, %v1060
        %v1065 = vadd.f32 %v1053, %v1061
        %s1066 = sld [smem:[#allocation2 + $0x27]]
        %v1067 = vstv %s1066
        %v1068 = vmul.f32 %v1067, %v988
        %v1069 = vmul.f32 %v1067, %v989
        %v1072 = vrot.slane %v1068, 3
        %v1073 = vrot.slane %v1069, 3
        %v1076 = vadd.f32 %v1064, %v1072
        %v1077 = vadd.f32 %v1065, %v1073
        %s1078 = sld [smem:[#allocation2 + $0x28]]
        %v1079 = vstv %s1078
        %v1080 = vmul.f32 %v1079, %v988
        %v1081 = vmul.f32 %v1079, %v989
        %s1082 = sld [smem:[#allocation2 + $0x2e]]
        %v1083 = vstv %s1082
        %v1084 = vadd.f32 %v1080, %v1083
        %v1085 = vadd.f32 %v1081, %v1083
        %s1086 = sld [smem:[#allocation2 + $0x29]]
        %v1087 = vstv %s1086
        %v1088 = vmul.f32 %v1087, %v988
        %v1089 = vmul.f32 %v1087, %v989
        %v1092 = vrot.slane %v1088, 1
        %v1093 = vrot.slane %v1089, 1
        %v1096 = vadd.f32 %v1084, %v1092
        %v1097 = vadd.f32 %v1085, %v1093
        %s1098 = sld [smem:[#allocation2 + $0x2a]]
        %v1099 = vstv %s1098
        %v1100 = vmul.f32 %v1099, %v988
        %v1101 = vmul.f32 %v1099, %v989
        %v1104 = vrot.slane %v1100, 2
        %v1105 = vrot.slane %v1101, 2
        %v1108 = vadd.f32 %v1096, %v1104
        %v1109 = vadd.f32 %v1097, %v1105
        %s1110 = sld [smem:[#allocation2 + $0x2b]]
        %v1111 = vstv %s1110
        %v1112 = vmul.f32 %v1111, %v988
        %v1113 = vmul.f32 %v1111, %v989
        %v1116 = vrot.slane %v1112, 3
        %v1117 = vrot.slane %v1113, 3
        %v1120 = vadd.f32 %v1108, %v1116
        %v1121 = vadd.f32 %v1109, %v1117
        %v1124 = vrot.slane %v1076, 7
        %v1125 = vrot.slane %v1077, 7
        %v1130 = vrot.slane %v1120, 6
        %v1131 = vrot.slane %v1121, 6
        %v1134 = vsel %vm535, %v1032, %v1124
        %v1135 = vsel %vm535, %v1033, %v1125
        %v1136 = vsel %vm538, %v1134, %v1130
        %v1137 = vsel %vm538, %v1135, %v1131
        %v1140 = vcombine.low %v1136, %v1137
        %1142 = vst [vmem:[%s292] sm:$0x77] %v1140
        %v1143 = vadd.f32 %v832, 1.0
        %v1144 = vmul.f32 %v1143, 0.5
        %v1145 = vadd.f32 %v849, 1.0
        %v1146 = vmul.f32 %v1145, 0.5
        %v1147 = vlaneseq
        %v1148 = vand.u32 %v1147, 127
        %vm1149 = vcmp.eq.s32.totalorder %v1148, 0
        %v1150 = vsel %vm1149, %v1144, %v1146
        %vm1151 = vcmask 11264
        %1152 = vst.msk [vmem:[%s296] sm:$0xf] %vm1151, %v1150
        %p1153 = scmp.lt.s32.totalorder %s19, 1
        %s1154 = scalar_select %p1153, %s19, 1
        %s1155 = smul.addr %s1154, 2
        %s1156 = smul.addr %s1155, 4
        %s1157 = scalar_lea.vmem %s5, %s1156
        %p1158 = scmp.lt.s32.totalorder %s19, 1
        %s1159 = scalar_select %p1158, %s19, 1
        %s1160 = smul.addr %s1159, 4
        %s1161 = scalar_lea.vmem %s6, %s1160
        // Predicated region
        $region45: #{forward.1} parent=39 // pred_check
          %p1162 = pneg %p152
        $region46: #{forward.1} parent=39 // pred_check_branch
          %1164 = sbr.rel (%p1162) target = $region48
        $region47: #{forward.1} parent=39 // pred_region
          _
        $region48: #{forward.1} parent=39 // pred_fallthru
          _
        // Predicated region
        $region49: #{forward.1} parent=39 // pred_check
          %p1165 = pneg %p178
        $region50: #{forward.1} parent=39 // pred_check_branch
          %1167 = sbr.rel (%p1165) target = $region52
        $region51: #{forward.1} parent=39 // pred_region
          _
        $region52: #{forward.1} parent=39 // pred_fallthru
          _
      $region40: #{forward.1} parent=5 // pred_fallthru
        _
      %p1168 = scmp.le.s32.totalorder 2, %s14
      // Predicated region
      $region53: #{forward.1} parent=5 // pred_check
        %p1169 = pneg %p1168
      $region54: #{forward.1} parent=5 // pred_check_branch
        %1171 = sbr.rel (%p1169) target = $region56
      $region55: #{forward.1} parent=5 // pred_region
        %s1172 = ssub.s32 %s14, 2
        // Predicated region
        $region57: #{forward.1} parent=55 // pred_check
          %p1173 = pneg %p158
        $region58: #{forward.1} parent=55 // pred_check_branch
          %1175 = sbr.rel (%p1173) target = $region60
        $region59: #{forward.1} parent=55 // pred_region
          %p1176 = scmp.lt.s32.totalorder %s20, 1
          %s1177 = scalar_select %p1176, %s20, 1
          %s1178 = smul.addr %s1177, 2
          %s1179 = smul.addr %s1178, 4
          %s1180 = scalar_lea.vmem %s5, %s1179
        $region60: #{forward.1} parent=55 // pred_fallthru
          _
        // Predicated region
        $region61: #{forward.1} parent=55 // pred_check
          %p1181 = pneg %p184
        $region62: #{forward.1} parent=55 // pred_check_branch
          %1183 = sbr.rel (%p1181) target = $region64
        $region63: #{forward.1} parent=55 // pred_region
          %p1184 = scmp.lt.s32.totalorder %s20, 1
          %s1185 = scalar_select %p1184, %s20, 1
          %s1186 = smul.addr %s1185, 4
          %s1187 = scalar_lea.vmem %s6, %s1186
        $region64: #{forward.1} parent=55 // pred_fallthru
          _
      $region56: #{forward.1} parent=5 // pred_fallthru
        _
    $region6: #{forward.1} parent=1 // loop_footer
      %s18 = sadd.s32 1, %s14
    $region7: #{forward.1} parent=1 // loop_footer_branch
      %13 = sbr.rel target = $region3
    $region8: #{forward.1} parent=1 // loop_exit
      _
    %1188 = vsyncpa [#allocation3], 1
    %s1189 = scalar_lea.sflag [#allocation3], 1
    %1190 = vsyncpa %s1189, 1

</llo_original>
